<compile_context>
chip_gen: v7x
topology: tpu7x:2x2x1
jax: 0.10.0
libtpu: 0.0.40
codegen_flags: <defaults>
</compile_context>

<pallas_src>
import functools

import numpy as np
import jax
import jax.numpy as jnp
from jax.experimental import pallas as pl
from jax.experimental.pallas import tpu as pltpu


def xunitd_kernel(x_ref, w1t_ref, b1_ref, wdw_ref, bdw_ref, mask_ref, o_ref, *,
                  K, W, tc):
    # x_ref    : (C, HW)      full-channel input for one image (HW = H*W)
    # w1t_ref  : (C, C)       1x1 conv weight, rows = out channel, cols = in channel
    # b1_ref   : (C, 1)       1x1 conv bias
    # wdw_ref  : (C, K*K)     depthwise taps, (dy, dx) row-major per channel
    # bdw_ref  : (C, 1)       depthwise bias
    # mask_ref : (K*K, 1, HW) 0/1 validity mask per tap (zero padding of K//2)
    # o_ref    : (tc, HW)     output block for this (image, channel-tile)
    HW = x_ref.shape[1]
    P = K // 2
    cj = pl.program_id(1)
    c0 = pl.multiple_of(cj * tc, tc)          # sublane-aligned channel-tile start

    x_all = x_ref[...]                        # (C, HW), kept in input dtype for the MXU

    # ---- 1x1 pointwise conv + bias + ReLU: one MXU matmul per channel tile ----
    w1_t = w1t_ref[pl.ds(c0, tc), :]          # (tc, C)
    a = jnp.dot(w1_t, x_all, preferred_element_type=jnp.float32)    # (tc, HW) f32
    a = a + b1_ref[pl.ds(c0, tc), :]          # (tc, 1) broadcast over lanes
    a = jnp.maximum(a, 0.0)

    # ---- depthwise KxK conv, zero padding P, over the flattened spatial axis ----
    # Tap (dy, dx) reads a[h+dy-P, w+dx-P]; on the flat axis that is a lane roll by
    # (dy-P)*W + (dx-P) (XLU), with a precomputed 0/1 mask zeroing out-of-image taps.
    taps = wdw_ref[pl.ds(c0, tc), :]          # (tc, K*K)
    acc = jnp.zeros((tc, HW), jnp.float32)
    t = 0
    for dy in range(K):                       # statically unrolled taps
        u = dy - P
        a_h = pltpu.roll(a, shift=(-u * W) % HW, axis=1) if u != 0 else a
        for dx in range(K):
            v = dx - P
            a_s = pltpu.roll(a_h, shift=(-v) % HW, axis=1) if v != 0 else a_h
            m = mask_ref[t]                   # (1, HW) 0/1 float mask
            acc = acc + (a_s * m) * taps[:, t:t + 1]
            t += 1
    a = acc + bdw_ref[pl.ds(c0, tc), :]

    # ---- sigmoid gate (EUP exp + reciprocal) and residual multiply ----
    gate = pl.reciprocal(1.0 + jnp.exp(-a), approx=False)
    x_c = x_ref[pl.ds(c0, tc), :]             # this tile's input channels (aligned slice)
    o_ref[...] = (x_c * gate).astype(o_ref.dtype)


def xunitd_pallas(x, w1, b1, wdw, bdw, *, tc=None):
    """xUnitD forward.

    x   : (N, C, H, W)  input, NCHW (PyTorch layout)
    w1  : (C, C, 1, 1)  1x1 Conv2d weight
    b1  : (C,)          1x1 Conv2d bias
    wdw : (C, 1, K, K)  depthwise Conv2d weight (groups=C)
    bdw : (C,)          depthwise Conv2d bias
    """
    N, C, H, W = x.shape
    K = wdw.shape[-1]
    P = K // 2
    HW = H * W

    if tc is None:                            # output-channel tile (2nd parallel axis)
        tc = 64 if (C % 64 == 0) else C
    assert C % tc == 0 and (tc % 8 == 0 or tc == C), (C, tc)

    # Free layout changes only (reshapes of contiguous memory, no transposes).
    xf = x.reshape(N, C, HW)
    w1t = w1.reshape(C, C)                    # (out, in)
    wdw2 = wdw.reshape(C, K * K)              # (channel, tap) row-major over (dy, dx)
    b1c = b1.reshape(C, 1)
    bdwc = bdw.reshape(C, 1)

    # Per-tap validity masks for the zero-padded window, on the flattened spatial axis.
    hh = np.arange(H)[:, None]
    ww = np.arange(W)[None, :]
    rows = []
    for dy in range(K):
        for dx in range(K):
            u, v = dy - P, dx - P
            rows.append(((hh + u >= 0) & (hh + u < H) &
                         (ww + v >= 0) & (ww + v < W)).reshape(HW))
    masks = jnp.asarray(np.stack(rows)[:, None, :].astype(np.float32))   # (K*K,1,HW)

    kernel = functools.partial(xunitd_kernel, K=K, W=W, tc=tc)
    out = pl.pallas_call(
        kernel,
        out_shape=jax.ShapeDtypeStruct((N, C, HW), x.dtype),
        grid=(N, C // tc),
        in_specs=[
            pl.BlockSpec((None, C, HW), lambda n, cj: (n, 0, 0)),    # x (all channels)
            pl.BlockSpec((C, C), lambda n, cj: (0, 0)),              # 1x1 weight (out,in)
            pl.BlockSpec((C, 1), lambda n, cj: (0, 0)),              # 1x1 bias
            pl.BlockSpec((C, K * K), lambda n, cj: (0, 0)),          # depthwise taps
            pl.BlockSpec((C, 1), lambda n, cj: (0, 0)),              # depthwise bias
            pl.BlockSpec((K * K, 1, HW), lambda n, cj: (0, 0, 0)),   # pad masks
        ],
        out_specs=pl.BlockSpec((None, tc, HW), lambda n, cj: (n, cj, 0)),
        compiler_params=pltpu.CompilerParams(
            dimension_semantics=("parallel", "parallel"),
            # Raise the scoped-VMEM cap above the 16/32 MiB defaults; blocks here are
            # small, and for big images tc (plus an H-tile axis) must keep live
            # buffers within ~24-28 MiB on v7x (64 MiB physical VMEM).
            vmem_limit_bytes=64 * 1024 * 1024,
        ),
    )(xf, w1t, b1c, wdw2, bdwc, masks)

    return out.reshape(N, C, H, W)


def xunitd_reference(x, w1, b1, wdw, bdw):
    """Pure-JAX reference (lax convolutions) with identical semantics."""
    C = x.shape[1]
    a = jax.lax.conv_general_dilated(
        x, w1, (1, 1), "VALID",
        dimension_numbers=("NCHW", "OIHW", "NCHW")) + b1[None, :, None, None]
    a = jax.nn.relu(a)
    a = jax.lax.conv_general_dilated(
        a, wdw, (1, 1), "SAME",
        dimension_numbers=("NCHW", "OIHW", "NCHW"),
        feature_group_count=C) + bdw[None, :, None, None]
    return x * jax.nn.sigmoid(a)


if __name__ == "__main__":
    # Small shapes consistent with the module: num_features=64 (default), kernel_size=5.
    N, C, H, W, K = 2, 64, 16, 16, 5

    key = jax.random.PRNGKey(0)
    kx, k1, k2, k3, k4 = jax.random.split(key, 5)
    x = jax.random.normal(kx, (N, C, H, W), dtype=jnp.float32)
    w1 = 0.2 * jax.random.normal(k1, (C, C, 1, 1), dtype=jnp.float32)
    b1 = 0.1 * jax.random.normal(k2, (C,), dtype=jnp.float32)
    wdw = 0.2 * jax.random.normal(k3, (C, 1, K, K), dtype=jnp.float32)
    bdw = 0.1 * jax.random.normal(k4, (C,), dtype=jnp.float32)

    # tc=32 exercises the (batch x channel-tile) grid = (2, 2).
    out = jax.block_until_ready(xunitd_pallas(x, w1, b1, wdw, bdw, tc=32))
    ref = jax.block_until_ready(xunitd_reference(x, w1, b1, wdw, bdw))

    assert out.shape == x.shape and out.dtype == x.dtype
    max_err = float(jnp.max(jnp.abs(out - ref)))
    assert max_err < 1e-3, f"max abs err = {max_err}"
    print("KERNEL_OK")
</pallas_src>

<mosaic_0001>
module attributes {stable_mosaic.version = 11 : i64} {
  func.func @xunitd_kernel(%arg0: i32, %arg1: i32, %arg2: memref<1x64x256xf32, #tpu.memory_space<vmem>>, %arg3: memref<64x64xf32, #tpu.memory_space<vmem>>, %arg4: memref<64x1xf32, #tpu.memory_space<vmem>>, %arg5: memref<64x25xf32, #tpu.memory_space<vmem>>, %arg6: memref<64x1xf32, #tpu.memory_space<vmem>>, %arg7: memref<25x1x256xf32, #tpu.memory_space<vmem>>, %arg8: memref<1x32x256xf32, #tpu.memory_space<vmem>>) attributes {dimension_semantics = [#tpu.dimension_semantics<parallel>, #tpu.dimension_semantics<parallel>], iteration_bounds = array<i64: 2, 2>, scalar_prefetch = 0 : i64, scratch_operands = 0 : i64, tpu.core_type = #tpu.core_type<tc>, window_params = [{transform_indices = @transform_0, window_bounds = array<i64: 1, 64, 256>}, {pipeline_mode = #tpu.pipeline_mode<synchronous>, transform_indices = @transform_1, window_bounds = array<i64: 64, 64>}, {pipeline_mode = #tpu.pipeline_mode<synchronous>, transform_indices = @transform_2, window_bounds = array<i64: 64, 1>}, {pipeline_mode = #tpu.pipeline_mode<synchronous>, transform_indices = @transform_3, window_bounds = array<i64: 64, 25>}, {pipeline_mode = #tpu.pipeline_mode<synchronous>, transform_indices = @transform_4, window_bounds = array<i64: 64, 1>}, {pipeline_mode = #tpu.pipeline_mode<synchronous>, transform_indices = @transform_5, window_bounds = array<i64: 25, 1, 256>}, {transform_indices = @transform_6, window_bounds = array<i64: 1, 32, 256>}]} {
    %c32_i32 = arith.constant 32 : i32
    %0 = arith.muli %arg1, %c32_i32 : i32
    %1 = tpu.assume_multiple %0, 32 : i32
    %c0 = arith.constant 0 : index
    %c0_0 = arith.constant 0 : index
    %c0_1 = arith.constant 0 : index
    %2 = vector.load %arg2[%c0, %c0_0, %c0_1] : memref<1x64x256xf32, #tpu.memory_space<vmem>>, vector<1x64x256xf32>
    %3 = vector.shape_cast %2 : vector<1x64x256xf32> to vector<64x256xf32>
    %4 = arith.index_cast %1 : i32 to index
    %c0_2 = arith.constant 0 : index
    %5 = vector.load %arg3[%4, %c0_2] : memref<64x64xf32, #tpu.memory_space<vmem>>, vector<32x64xf32>
    %cst = arith.constant dense<0.000000e+00> : vector<32x256xf32>
    %6 = tpu.matmul %5, %3, %cst {dimension_numbers = #tpu.dot_dimension_numbers<[1], [0], [0], [1], [0, 0, 1, 1], [], []>} : vector<32x64xf32>, vector<64x256xf32>, vector<32x256xf32> -> vector<32x256xf32>
    %7 = arith.index_cast %1 : i32 to index
    %c0_3 = arith.constant 0 : index
    %8 = vector.load %arg4[%7, %c0_3] : memref<64x1xf32, #tpu.memory_space<vmem>>, vector<32x1xf32>
    %9 = vector.broadcast %8 : vector<32x1xf32> to vector<32x256xf32>
    %10 = arith.addf %6, %9 : vector<32x256xf32>
    %cst_4 = arith.constant 0.000000e+00 : f32
    %11 = vector.broadcast %cst_4 : f32 to vector<32x256xf32>
    %12 = arith.maximumf %10, %11 : vector<32x256xf32>
    %13 = arith.index_cast %1 : i32 to index
    %c0_5 = arith.constant 0 : index
    %14 = vector.load %arg5[%13, %c0_5] : memref<64x25xf32, #tpu.memory_space<vmem>>, vector<32x25xf32>
    %cst_6 = arith.constant 0.000000e+00 : f32
    %15 = vector.broadcast %cst_6 : f32 to vector<32x256xf32>
    %c32_i32_7 = arith.constant 32 : i32
    %16 = tpu.dynamic_rotate %12 by %c32_i32_7 dim 1 : vector<32x256xf32>, i32 -> vector<32x256xf32>
    %c2_i32 = arith.constant 2 : i32
    %17 = tpu.dynamic_rotate %16 by %c2_i32 dim 1 : vector<32x256xf32>, i32 -> vector<32x256xf32>
    %c0_8 = arith.constant 0 : index
    %c0_9 = arith.constant 0 : index
    %c0_10 = arith.constant 0 : index
    %18 = vector.load %arg7[%c0_8, %c0_9, %c0_10] : memref<25x1x256xf32, #tpu.memory_space<vmem>>, vector<1x1x256xf32>
    %19 = vector.shape_cast %18 : vector<1x1x256xf32> to vector<1x256xf32>
    %20 = vector.broadcast %19 : vector<1x256xf32> to vector<32x256xf32>
    %21 = arith.mulf %17, %20 : vector<32x256xf32>
    %22 = vector.extract_strided_slice %14 {offsets = [0, 0], sizes = [32, 1], strides = [1, 1]} : vector<32x25xf32> to vector<32x1xf32>
    %23 = vector.broadcast %22 : vector<32x1xf32> to vector<32x256xf32>
    %24 = arith.mulf %21, %23 : vector<32x256xf32>
    %25 = arith.addf %15, %24 : vector<32x256xf32>
    %c1_i32 = arith.constant 1 : i32
    %26 = tpu.dynamic_rotate %16 by %c1_i32 dim 1 : vector<32x256xf32>, i32 -> vector<32x256xf32>
    %c1 = arith.constant 1 : index
    %c0_11 = arith.constant 0 : index
    %c0_12 = arith.constant 0 : index
    %27 = vector.load %arg7[%c1, %c0_11, %c0_12] : memref<25x1x256xf32, #tpu.memory_space<vmem>>, vector<1x1x256xf32>
    %28 = vector.shape_cast %27 : vector<1x1x256xf32> to vector<1x256xf32>
    %29 = vector.broadcast %28 : vector<1x256xf32> to vector<32x256xf32>
    %30 = arith.mulf %26, %29 : vector<32x256xf32>
    %31 = vector.extract_strided_slice %14 {offsets = [0, 1], sizes = [32, 1], strides = [1, 1]} : vector<32x25xf32> to vector<32x1xf32>
    %32 = vector.broadcast %31 : vector<32x1xf32> to vector<32x256xf32>
    %33 = arith.mulf %30, %32 : vector<32x256xf32>
    %34 = arith.addf %25, %33 : vector<32x256xf32>
    %c2 = arith.constant 2 : index
    %c0_13 = arith.constant 0 : index
    %c0_14 = arith.constant 0 : index
    %35 = vector.load %arg7[%c2, %c0_13, %c0_14] : memref<25x1x256xf32, #tpu.memory_space<vmem>>, vector<1x1x256xf32>
    %36 = vector.shape_cast %35 : vector<1x1x256xf32> to vector<1x256xf32>
    %37 = vector.broadcast %36 : vector<1x256xf32> to vector<32x256xf32>
    %38 = arith.mulf %16, %37 : vector<32x256xf32>
    %39 = vector.extract_strided_slice %14 {offsets = [0, 2], sizes = [32, 1], strides = [1, 1]} : vector<32x25xf32> to vector<32x1xf32>
    %40 = vector.broadcast %39 : vector<32x1xf32> to vector<32x256xf32>
    %41 = arith.mulf %38, %40 : vector<32x256xf32>
    %42 = arith.addf %34, %41 : vector<32x256xf32>
    %c255_i32 = arith.constant 255 : i32
    %43 = tpu.dynamic_rotate %16 by %c255_i32 dim 1 : vector<32x256xf32>, i32 -> vector<32x256xf32>
    %c3 = arith.constant 3 : index
    %c0_15 = arith.constant 0 : index
    %c0_16 = arith.constant 0 : index
    %44 = vector.load %arg7[%c3, %c0_15, %c0_16] : memref<25x1x256xf32, #tpu.memory_space<vmem>>, vector<1x1x256xf32>
    %45 = vector.shape_cast %44 : vector<1x1x256xf32> to vector<1x256xf32>
    %46 = vector.broadcast %45 : vector<1x256xf32> to vector<32x256xf32>
    %47 = arith.mulf %43, %46 : vector<32x256xf32>
    %48 = vector.extract_strided_slice %14 {offsets = [0, 3], sizes = [32, 1], strides = [1, 1]} : vector<32x25xf32> to vector<32x1xf32>
    %49 = vector.broadcast %48 : vector<32x1xf32> to vector<32x256xf32>
    %50 = arith.mulf %47, %49 : vector<32x256xf32>
    %51 = arith.addf %42, %50 : vector<32x256xf32>
    %c254_i32 = arith.constant 254 : i32
    %52 = tpu.dynamic_rotate %16 by %c254_i32 dim 1 : vector<32x256xf32>, i32 -> vector<32x256xf32>
    %c4 = arith.constant 4 : index
    %c0_17 = arith.constant 0 : index
    %c0_18 = arith.constant 0 : index
    %53 = vector.load %arg7[%c4, %c0_17, %c0_18] : memref<25x1x256xf32, #tpu.memory_space<vmem>>, vector<1x1x256xf32>
    %54 = vector.shape_cast %53 : vector<1x1x256xf32> to vector<1x256xf32>
    %55 = vector.broadcast %54 : vector<1x256xf32> to vector<32x256xf32>
    %56 = arith.mulf %52, %55 : vector<32x256xf32>
    %57 = vector.extract_strided_slice %14 {offsets = [0, 4], sizes = [32, 1], strides = [1, 1]} : vector<32x25xf32> to vector<32x1xf32>
    %58 = vector.broadcast %57 : vector<32x1xf32> to vector<32x256xf32>
    %59 = arith.mulf %56, %58 : vector<32x256xf32>
    %60 = arith.addf %51, %59 : vector<32x256xf32>
    %c16_i32 = arith.constant 16 : i32
    %61 = tpu.dynamic_rotate %12 by %c16_i32 dim 1 : vector<32x256xf32>, i32 -> vector<32x256xf32>
    %c2_i32_19 = arith.constant 2 : i32
    %62 = tpu.dynamic_rotate %61 by %c2_i32_19 dim 1 : vector<32x256xf32>, i32 -> vector<32x256xf32>
    %c5 = arith.constant 5 : index
    %c0_20 = arith.constant 0 : index
    %c0_21 = arith.constant 0 : index
    %63 = vector.load %arg7[%c5, %c0_20, %c0_21] : memref<25x1x256xf32, #tpu.memory_space<vmem>>, vector<1x1x256xf32>
    %64 = vector.shape_cast %63 : vector<1x1x256xf32> to vector<1x256xf32>
    %65 = vector.broadcast %64 : vector<1x256xf32> to vector<32x256xf32>
    %66 = arith.mulf %62, %65 : vector<32x256xf32>
    %67 = vector.extract_strided_slice %14 {offsets = [0, 5], sizes = [32, 1], strides = [1, 1]} : vector<32x25xf32> to vector<32x1xf32>
    %68 = vector.broadcast %67 : vector<32x1xf32> to vector<32x256xf32>
    %69 = arith.mulf %66, %68 : vector<32x256xf32>
    %70 = arith.addf %60, %69 : vector<32x256xf32>
    %c1_i32_22 = arith.constant 1 : i32
    %71 = tpu.dynamic_rotate %61 by %c1_i32_22 dim 1 : vector<32x256xf32>, i32 -> vector<32x256xf32>
    %c6 = arith.constant 6 : index
    %c0_23 = arith.constant 0 : index
    %c0_24 = arith.constant 0 : index
    %72 = vector.load %arg7[%c6, %c0_23, %c0_24] : memref<25x1x256xf32, #tpu.memory_space<vmem>>, vector<1x1x256xf32>
    %73 = vector.shape_cast %72 : vector<1x1x256xf32> to vector<1x256xf32>
    %74 = vector.broadcast %73 : vector<1x256xf32> to vector<32x256xf32>
    %75 = arith.mulf %71, %74 : vector<32x256xf32>
    %76 = vector.extract_strided_slice %14 {offsets = [0, 6], sizes = [32, 1], strides = [1, 1]} : vector<32x25xf32> to vector<32x1xf32>
    %77 = vector.broadcast %76 : vector<32x1xf32> to vector<32x256xf32>
    %78 = arith.mulf %75, %77 : vector<32x256xf32>
    %79 = arith.addf %70, %78 : vector<32x256xf32>
    %c7 = arith.constant 7 : index
    %c0_25 = arith.constant 0 : index
    %c0_26 = arith.constant 0 : index
    %80 = vector.load %arg7[%c7, %c0_25, %c0_26] : memref<25x1x256xf32, #tpu.memory_space<vmem>>, vector<1x1x256xf32>
    %81 = vector.shape_cast %80 : vector<1x1x256xf32> to vector<1x256xf32>
    %82 = vector.broadcast %81 : vector<1x256xf32> to vector<32x256xf32>
    %83 = arith.mulf %61, %82 : vector<32x256xf32>
    %84 = vector.extract_strided_slice %14 {offsets = [0, 7], sizes = [32, 1], strides = [1, 1]} : vector<32x25xf32> to vector<32x1xf32>
    %85 = vector.broadcast %84 : vector<32x1xf32> to vector<32x256xf32>
    %86 = arith.mulf %83, %85 : vector<32x256xf32>
    %87 = arith.addf %79, %86 : vector<32x256xf32>
    %c255_i32_27 = arith.constant 255 : i32
    %88 = tpu.dynamic_rotate %61 by %c255_i32_27 dim 1 : vector<32x256xf32>, i32 -> vector<32x256xf32>
    %c8 = arith.constant 8 : index
    %c0_28 = arith.constant 0 : index
    %c0_29 = arith.constant 0 : index
    %89 = vector.load %arg7[%c8, %c0_28, %c0_29] : memref<25x1x256xf32, #tpu.memory_space<vmem>>, vector<1x1x256xf32>
    %90 = vector.shape_cast %89 : vector<1x1x256xf32> to vector<1x256xf32>
    %91 = vector.broadcast %90 : vector<1x256xf32> to vector<32x256xf32>
    %92 = arith.mulf %88, %91 : vector<32x256xf32>
    %93 = vector.extract_strided_slice %14 {offsets = [0, 8], sizes = [32, 1], strides = [1, 1]} : vector<32x25xf32> to vector<32x1xf32>
    %94 = vector.broadcast %93 : vector<32x1xf32> to vector<32x256xf32>
    %95 = arith.mulf %92, %94 : vector<32x256xf32>
    %96 = arith.addf %87, %95 : vector<32x256xf32>
    %c254_i32_30 = arith.constant 254 : i32
    %97 = tpu.dynamic_rotate %61 by %c254_i32_30 dim 1 : vector<32x256xf32>, i32 -> vector<32x256xf32>
    %c9 = arith.constant 9 : index
    %c0_31 = arith.constant 0 : index
    %c0_32 = arith.constant 0 : index
    %98 = vector.load %arg7[%c9, %c0_31, %c0_32] : memref<25x1x256xf32, #tpu.memory_space<vmem>>, vector<1x1x256xf32>
    %99 = vector.shape_cast %98 : vector<1x1x256xf32> to vector<1x256xf32>
    %100 = vector.broadcast %99 : vector<1x256xf32> to vector<32x256xf32>
    %101 = arith.mulf %97, %100 : vector<32x256xf32>
    %102 = vector.extract_strided_slice %14 {offsets = [0, 9], sizes = [32, 1], strides = [1, 1]} : vector<32x25xf32> to vector<32x1xf32>
    %103 = vector.broadcast %102 : vector<32x1xf32> to vector<32x256xf32>
    %104 = arith.mulf %101, %103 : vector<32x256xf32>
    %105 = arith.addf %96, %104 : vector<32x256xf32>
    %c2_i32_33 = arith.constant 2 : i32
    %106 = tpu.dynamic_rotate %12 by %c2_i32_33 dim 1 : vector<32x256xf32>, i32 -> vector<32x256xf32>
    %c10 = arith.constant 10 : index
    %c0_34 = arith.constant 0 : index
    %c0_35 = arith.constant 0 : index
    %107 = vector.load %arg7[%c10, %c0_34, %c0_35] : memref<25x1x256xf32, #tpu.memory_space<vmem>>, vector<1x1x256xf32>
    %108 = vector.shape_cast %107 : vector<1x1x256xf32> to vector<1x256xf32>
    %109 = vector.broadcast %108 : vector<1x256xf32> to vector<32x256xf32>
    %110 = arith.mulf %106, %109 : vector<32x256xf32>
    %111 = vector.extract_strided_slice %14 {offsets = [0, 10], sizes = [32, 1], strides = [1, 1]} : vector<32x25xf32> to vector<32x1xf32>
    %112 = vector.broadcast %111 : vector<32x1xf32> to vector<32x256xf32>
    %113 = arith.mulf %110, %112 : vector<32x256xf32>
    %114 = arith.addf %105, %113 : vector<32x256xf32>
    %c1_i32_36 = arith.constant 1 : i32
    %115 = tpu.dynamic_rotate %12 by %c1_i32_36 dim 1 : vector<32x256xf32>, i32 -> vector<32x256xf32>
    %c11 = arith.constant 11 : index
    %c0_37 = arith.constant 0 : index
    %c0_38 = arith.constant 0 : index
    %116 = vector.load %arg7[%c11, %c0_37, %c0_38] : memref<25x1x256xf32, #tpu.memory_space<vmem>>, vector<1x1x256xf32>
    %117 = vector.shape_cast %116 : vector<1x1x256xf32> to vector<1x256xf32>
    %118 = vector.broadcast %117 : vector<1x256xf32> to vector<32x256xf32>
    %119 = arith.mulf %115, %118 : vector<32x256xf32>
    %120 = vector.extract_strided_slice %14 {offsets = [0, 11], sizes = [32, 1], strides = [1, 1]} : vector<32x25xf32> to vector<32x1xf32>
    %121 = vector.broadcast %120 : vector<32x1xf32> to vector<32x256xf32>
    %122 = arith.mulf %119, %121 : vector<32x256xf32>
    %123 = arith.addf %114, %122 : vector<32x256xf32>
    %c12 = arith.constant 12 : index
    %c0_39 = arith.constant 0 : index
    %c0_40 = arith.constant 0 : index
    %124 = vector.load %arg7[%c12, %c0_39, %c0_40] : memref<25x1x256xf32, #tpu.memory_space<vmem>>, vector<1x1x256xf32>
    %125 = vector.shape_cast %124 : vector<1x1x256xf32> to vector<1x256xf32>
    %126 = vector.broadcast %125 : vector<1x256xf32> to vector<32x256xf32>
    %127 = arith.mulf %12, %126 : vector<32x256xf32>
    %128 = vector.extract_strided_slice %14 {offsets = [0, 12], sizes = [32, 1], strides = [1, 1]} : vector<32x25xf32> to vector<32x1xf32>
    %129 = vector.broadcast %128 : vector<32x1xf32> to vector<32x256xf32>
    %130 = arith.mulf %127, %129 : vector<32x256xf32>
    %131 = arith.addf %123, %130 : vector<32x256xf32>
    %c255_i32_41 = arith.constant 255 : i32
    %132 = tpu.dynamic_rotate %12 by %c255_i32_41 dim 1 : vector<32x256xf32>, i32 -> vector<32x256xf32>
    %c13 = arith.constant 13 : index
    %c0_42 = arith.constant 0 : index
    %c0_43 = arith.constant 0 : index
    %133 = vector.load %arg7[%c13, %c0_42, %c0_43] : memref<25x1x256xf32, #tpu.memory_space<vmem>>, vector<1x1x256xf32>
    %134 = vector.shape_cast %133 : vector<1x1x256xf32> to vector<1x256xf32>
    %135 = vector.broadcast %134 : vector<1x256xf32> to vector<32x256xf32>
    %136 = arith.mulf %132, %135 : vector<32x256xf32>
    %137 = vector.extract_strided_slice %14 {offsets = [0, 13], sizes = [32, 1], strides = [1, 1]} : vector<32x25xf32> to vector<32x1xf32>
    %138 = vector.broadcast %137 : vector<32x1xf32> to vector<32x256xf32>
    %139 = arith.mulf %136, %138 : vector<32x256xf32>
    %140 = arith.addf %131, %139 : vector<32x256xf32>
    %c254_i32_44 = arith.constant 254 : i32
    %141 = tpu.dynamic_rotate %12 by %c254_i32_44 dim 1 : vector<32x256xf32>, i32 -> vector<32x256xf32>
    %c14 = arith.constant 14 : index
    %c0_45 = arith.constant 0 : index
    %c0_46 = arith.constant 0 : index
    %142 = vector.load %arg7[%c14, %c0_45, %c0_46] : memref<25x1x256xf32, #tpu.memory_space<vmem>>, vector<1x1x256xf32>
    %143 = vector.shape_cast %142 : vector<1x1x256xf32> to vector<1x256xf32>
    %144 = vector.broadcast %143 : vector<1x256xf32> to vector<32x256xf32>
    %145 = arith.mulf %141, %144 : vector<32x256xf32>
    %146 = vector.extract_strided_slice %14 {offsets = [0, 14], sizes = [32, 1], strides = [1, 1]} : vector<32x25xf32> to vector<32x1xf32>
    %147 = vector.broadcast %146 : vector<32x1xf32> to vector<32x256xf32>
    %148 = arith.mulf %145, %147 : vector<32x256xf32>
    %149 = arith.addf %140, %148 : vector<32x256xf32>
    %c240_i32 = arith.constant 240 : i32
    %150 = tpu.dynamic_rotate %12 by %c240_i32 dim 1 : vector<32x256xf32>, i32 -> vector<32x256xf32>
    %c2_i32_47 = arith.constant 2 : i32
    %151 = tpu.dynamic_rotate %150 by %c2_i32_47 dim 1 : vector<32x256xf32>, i32 -> vector<32x256xf32>
    %c15 = arith.constant 15 : index
    %c0_48 = arith.constant 0 : index
    %c0_49 = arith.constant 0 : index
    %152 = vector.load %arg7[%c15, %c0_48, %c0_49] : memref<25x1x256xf32, #tpu.memory_space<vmem>>, vector<1x1x256xf32>
    %153 = vector.shape_cast %152 : vector<1x1x256xf32> to vector<1x256xf32>
    %154 = vector.broadcast %153 : vector<1x256xf32> to vector<32x256xf32>
    %155 = arith.mulf %151, %154 : vector<32x256xf32>
    %156 = vector.extract_strided_slice %14 {offsets = [0, 15], sizes = [32, 1], strides = [1, 1]} : vector<32x25xf32> to vector<32x1xf32>
    %157 = vector.broadcast %156 : vector<32x1xf32> to vector<32x256xf32>
    %158 = arith.mulf %155, %157 : vector<32x256xf32>
    %159 = arith.addf %149, %158 : vector<32x256xf32>
    %c1_i32_50 = arith.constant 1 : i32
    %160 = tpu.dynamic_rotate %150 by %c1_i32_50 dim 1 : vector<32x256xf32>, i32 -> vector<32x256xf32>
    %c16 = arith.constant 16 : index
    %c0_51 = arith.constant 0 : index
    %c0_52 = arith.constant 0 : index
    %161 = vector.load %arg7[%c16, %c0_51, %c0_52] : memref<25x1x256xf32, #tpu.memory_space<vmem>>, vector<1x1x256xf32>
    %162 = vector.shape_cast %161 : vector<1x1x256xf32> to vector<1x256xf32>
    %163 = vector.broadcast %162 : vector<1x256xf32> to vector<32x256xf32>
    %164 = arith.mulf %160, %163 : vector<32x256xf32>
    %165 = vector.extract_strided_slice %14 {offsets = [0, 16], sizes = [32, 1], strides = [1, 1]} : vector<32x25xf32> to vector<32x1xf32>
    %166 = vector.broadcast %165 : vector<32x1xf32> to vector<32x256xf32>
    %167 = arith.mulf %164, %166 : vector<32x256xf32>
    %168 = arith.addf %159, %167 : vector<32x256xf32>
    %c17 = arith.constant 17 : index
    %c0_53 = arith.constant 0 : index
    %c0_54 = arith.constant 0 : index
    %169 = vector.load %arg7[%c17, %c0_53, %c0_54] : memref<25x1x256xf32, #tpu.memory_space<vmem>>, vector<1x1x256xf32>
    %170 = vector.shape_cast %169 : vector<1x1x256xf32> to vector<1x256xf32>
    %171 = vector.broadcast %170 : vector<1x256xf32> to vector<32x256xf32>
    %172 = arith.mulf %150, %171 : vector<32x256xf32>
    %173 = vector.extract_strided_slice %14 {offsets = [0, 17], sizes = [32, 1], strides = [1, 1]} : vector<32x25xf32> to vector<32x1xf32>
    %174 = vector.broadcast %173 : vector<32x1xf32> to vector<32x256xf32>
    %175 = arith.mulf %172, %174 : vector<32x256xf32>
    %176 = arith.addf %168, %175 : vector<32x256xf32>
    %c255_i32_55 = arith.constant 255 : i32
    %177 = tpu.dynamic_rotate %150 by %c255_i32_55 dim 1 : vector<32x256xf32>, i32 -> vector<32x256xf32>
    %c18 = arith.constant 18 : index
    %c0_56 = arith.constant 0 : index
    %c0_57 = arith.constant 0 : index
    %178 = vector.load %arg7[%c18, %c0_56, %c0_57] : memref<25x1x256xf32, #tpu.memory_space<vmem>>, vector<1x1x256xf32>
    %179 = vector.shape_cast %178 : vector<1x1x256xf32> to vector<1x256xf32>
    %180 = vector.broadcast %179 : vector<1x256xf32> to vector<32x256xf32>
    %181 = arith.mulf %177, %180 : vector<32x256xf32>
    %182 = vector.extract_strided_slice %14 {offsets = [0, 18], sizes = [32, 1], strides = [1, 1]} : vector<32x25xf32> to vector<32x1xf32>
    %183 = vector.broadcast %182 : vector<32x1xf32> to vector<32x256xf32>
    %184 = arith.mulf %181, %183 : vector<32x256xf32>
    %185 = arith.addf %176, %184 : vector<32x256xf32>
    %c254_i32_58 = arith.constant 254 : i32
    %186 = tpu.dynamic_rotate %150 by %c254_i32_58 dim 1 : vector<32x256xf32>, i32 -> vector<32x256xf32>
    %c19 = arith.constant 19 : index
    %c0_59 = arith.constant 0 : index
    %c0_60 = arith.constant 0 : index
    %187 = vector.load %arg7[%c19, %c0_59, %c0_60] : memref<25x1x256xf32, #tpu.memory_space<vmem>>, vector<1x1x256xf32>
    %188 = vector.shape_cast %187 : vector<1x1x256xf32> to vector<1x256xf32>
    %189 = vector.broadcast %188 : vector<1x256xf32> to vector<32x256xf32>
    %190 = arith.mulf %186, %189 : vector<32x256xf32>
    %191 = vector.extract_strided_slice %14 {offsets = [0, 19], sizes = [32, 1], strides = [1, 1]} : vector<32x25xf32> to vector<32x1xf32>
    %192 = vector.broadcast %191 : vector<32x1xf32> to vector<32x256xf32>
    %193 = arith.mulf %190, %192 : vector<32x256xf32>
    %194 = arith.addf %185, %193 : vector<32x256xf32>
    %c224_i32 = arith.constant 224 : i32
    %195 = tpu.dynamic_rotate %12 by %c224_i32 dim 1 : vector<32x256xf32>, i32 -> vector<32x256xf32>
    %c2_i32_61 = arith.constant 2 : i32
    %196 = tpu.dynamic_rotate %195 by %c2_i32_61 dim 1 : vector<32x256xf32>, i32 -> vector<32x256xf32>
    %c20 = arith.constant 20 : index
    %c0_62 = arith.constant 0 : index
    %c0_63 = arith.constant 0 : index
    %197 = vector.load %arg7[%c20, %c0_62, %c0_63] : memref<25x1x256xf32, #tpu.memory_space<vmem>>, vector<1x1x256xf32>
    %198 = vector.shape_cast %197 : vector<1x1x256xf32> to vector<1x256xf32>
    %199 = vector.broadcast %198 : vector<1x256xf32> to vector<32x256xf32>
    %200 = arith.mulf %196, %199 : vector<32x256xf32>
    %201 = vector.extract_strided_slice %14 {offsets = [0, 20], sizes = [32, 1], strides = [1, 1]} : vector<32x25xf32> to vector<32x1xf32>
    %202 = vector.broadcast %201 : vector<32x1xf32> to vector<32x256xf32>
    %203 = arith.mulf %200, %202 : vector<32x256xf32>
    %204 = arith.addf %194, %203 : vector<32x256xf32>
    %c1_i32_64 = arith.constant 1 : i32
    %205 = tpu.dynamic_rotate %195 by %c1_i32_64 dim 1 : vector<32x256xf32>, i32 -> vector<32x256xf32>
    %c21 = arith.constant 21 : index
    %c0_65 = arith.constant 0 : index
    %c0_66 = arith.constant 0 : index
    %206 = vector.load %arg7[%c21, %c0_65, %c0_66] : memref<25x1x256xf32, #tpu.memory_space<vmem>>, vector<1x1x256xf32>
    %207 = vector.shape_cast %206 : vector<1x1x256xf32> to vector<1x256xf32>
    %208 = vector.broadcast %207 : vector<1x256xf32> to vector<32x256xf32>
    %209 = arith.mulf %205, %208 : vector<32x256xf32>
    %210 = vector.extract_strided_slice %14 {offsets = [0, 21], sizes = [32, 1], strides = [1, 1]} : vector<32x25xf32> to vector<32x1xf32>
    %211 = vector.broadcast %210 : vector<32x1xf32> to vector<32x256xf32>
    %212 = arith.mulf %209, %211 : vector<32x256xf32>
    %213 = arith.addf %204, %212 : vector<32x256xf32>
    %c22 = arith.constant 22 : index
    %c0_67 = arith.constant 0 : index
    %c0_68 = arith.constant 0 : index
    %214 = vector.load %arg7[%c22, %c0_67, %c0_68] : memref<25x1x256xf32, #tpu.memory_space<vmem>>, vector<1x1x256xf32>
    %215 = vector.shape_cast %214 : vector<1x1x256xf32> to vector<1x256xf32>
    %216 = vector.broadcast %215 : vector<1x256xf32> to vector<32x256xf32>
    %217 = arith.mulf %195, %216 : vector<32x256xf32>
    %218 = vector.extract_strided_slice %14 {offsets = [0, 22], sizes = [32, 1], strides = [1, 1]} : vector<32x25xf32> to vector<32x1xf32>
    %219 = vector.broadcast %218 : vector<32x1xf32> to vector<32x256xf32>
    %220 = arith.mulf %217, %219 : vector<32x256xf32>
    %221 = arith.addf %213, %220 : vector<32x256xf32>
    %c255_i32_69 = arith.constant 255 : i32
    %222 = tpu.dynamic_rotate %195 by %c255_i32_69 dim 1 : vector<32x256xf32>, i32 -> vector<32x256xf32>
    %c23 = arith.constant 23 : index
    %c0_70 = arith.constant 0 : index
    %c0_71 = arith.constant 0 : index
    %223 = vector.load %arg7[%c23, %c0_70, %c0_71] : memref<25x1x256xf32, #tpu.memory_space<vmem>>, vector<1x1x256xf32>
    %224 = vector.shape_cast %223 : vector<1x1x256xf32> to vector<1x256xf32>
    %225 = vector.broadcast %224 : vector<1x256xf32> to vector<32x256xf32>
    %226 = arith.mulf %222, %225 : vector<32x256xf32>
    %227 = vector.extract_strided_slice %14 {offsets = [0, 23], sizes = [32, 1], strides = [1, 1]} : vector<32x25xf32> to vector<32x1xf32>
    %228 = vector.broadcast %227 : vector<32x1xf32> to vector<32x256xf32>
    %229 = arith.mulf %226, %228 : vector<32x256xf32>
    %230 = arith.addf %221, %229 : vector<32x256xf32>
    %c254_i32_72 = arith.constant 254 : i32
    %231 = tpu.dynamic_rotate %195 by %c254_i32_72 dim 1 : vector<32x256xf32>, i32 -> vector<32x256xf32>
    %c24 = arith.constant 24 : index
    %c0_73 = arith.constant 0 : index
    %c0_74 = arith.constant 0 : index
    %232 = vector.load %arg7[%c24, %c0_73, %c0_74] : memref<25x1x256xf32, #tpu.memory_space<vmem>>, vector<1x1x256xf32>
    %233 = vector.shape_cast %232 : vector<1x1x256xf32> to vector<1x256xf32>
    %234 = vector.broadcast %233 : vector<1x256xf32> to vector<32x256xf32>
    %235 = arith.mulf %231, %234 : vector<32x256xf32>
    %236 = vector.extract_strided_slice %14 {offsets = [0, 24], sizes = [32, 1], strides = [1, 1]} : vector<32x25xf32> to vector<32x1xf32>
    %237 = vector.broadcast %236 : vector<32x1xf32> to vector<32x256xf32>
    %238 = arith.mulf %235, %237 : vector<32x256xf32>
    %239 = arith.addf %230, %238 : vector<32x256xf32>
    %240 = arith.index_cast %1 : i32 to index
    %c0_75 = arith.constant 0 : index
    %241 = vector.load %arg6[%240, %c0_75] : memref<64x1xf32, #tpu.memory_space<vmem>>, vector<32x1xf32>
    %242 = vector.broadcast %241 : vector<32x1xf32> to vector<32x256xf32>
    %243 = arith.addf %239, %242 : vector<32x256xf32>
    %cst_76 = arith.constant 0.000000e+00 : f32
    %244 = vector.broadcast %cst_76 : f32 to vector<32x256xf32>
    %245 = arith.subf %244, %243 : vector<32x256xf32>
    %246 = math.exp %245 : vector<32x256xf32>
    %cst_77 = arith.constant 1.000000e+00 : f32
    %247 = vector.broadcast %cst_77 : f32 to vector<32x256xf32>
    %248 = arith.addf %247, %246 : vector<32x256xf32>
    %249 = tpu.reciprocal %248 : vector<32x256xf32> -> vector<32x256xf32>
    %c0_78 = arith.constant 0 : index
    %250 = arith.index_cast %1 : i32 to index
    %c0_79 = arith.constant 0 : index
    %251 = vector.load %arg2[%c0_78, %250, %c0_79] : memref<1x64x256xf32, #tpu.memory_space<vmem>>, vector<1x32x256xf32>
    %252 = vector.shape_cast %251 : vector<1x32x256xf32> to vector<32x256xf32>
    %253 = arith.mulf %252, %249 : vector<32x256xf32>
    %c0_80 = arith.constant 0 : index
    %c0_81 = arith.constant 0 : index
    %c0_82 = arith.constant 0 : index
    %254 = vector.load %arg8[%c0_80, %c0_81, %c0_82] : memref<1x32x256xf32, #tpu.memory_space<vmem>>, vector<1x32x256xf32>
    %255 = vector.shape_cast %254 : vector<1x32x256xf32> to vector<32x256xf32>
    %256 = vector.shape_cast %253 : vector<32x256xf32> to vector<1x32x256xf32>
    tpu.vector_store %arg8[%c0_80, %c0_81, %c0_82], %256 {strides = array<i32>} : memref<1x32x256xf32, #tpu.memory_space<vmem>>, vector<1x32x256xf32>,
    return
  }
  func.func @transform_0(%arg0: i32, %arg1: i32) -> (i32, i32, i32) {
    %c0_i32 = arith.constant 0 : i32
    %c0_i32_0 = arith.constant 0 : i32
    %c0_i32_1 = arith.constant 0 : i32
    return %arg0, %c0_i32, %c0_i32_0 : i32, i32, i32
  }
  func.func @transform_1(%arg0: i32, %arg1: i32) -> (i32, i32) {
    %c0_i32 = arith.constant 0 : i32
    %c0_i32_0 = arith.constant 0 : i32
    %c0_i32_1 = arith.constant 0 : i32
    return %c0_i32, %c0_i32_0 : i32, i32
  }
  func.func @transform_2(%arg0: i32, %arg1: i32) -> (i32, i32) {
    %c0_i32 = arith.constant 0 : i32
    %c0_i32_0 = arith.constant 0 : i32
    %c0_i32_1 = arith.constant 0 : i32
    return %c0_i32, %c0_i32_0 : i32, i32
  }
  func.func @transform_3(%arg0: i32, %arg1: i32) -> (i32, i32) {
    %c0_i32 = arith.constant 0 : i32
    %c0_i32_0 = arith.constant 0 : i32
    %c0_i32_1 = arith.constant 0 : i32
    return %c0_i32, %c0_i32_0 : i32, i32
  }
  func.func @transform_4(%arg0: i32, %arg1: i32) -> (i32, i32) {
    %c0_i32 = arith.constant 0 : i32
    %c0_i32_0 = arith.constant 0 : i32
    %c0_i32_1 = arith.constant 0 : i32
    return %c0_i32, %c0_i32_0 : i32, i32
  }
  func.func @transform_5(%arg0: i32, %arg1: i32) -> (i32, i32, i32) {
    %c0_i32 = arith.constant 0 : i32
    %c0_i32_0 = arith.constant 0 : i32
    %c0_i32_1 = arith.constant 0 : i32
    %c0_i32_2 = arith.constant 0 : i32
    return %c0_i32, %c0_i32_0, %c0_i32_1 : i32, i32, i32
  }
  func.func @transform_6(%arg0: i32, %arg1: i32) -> (i32, i32, i32) {
    %c0_i32 = arith.constant 0 : i32
    %c0_i32_0 = arith.constant 0 : i32
    return %arg0, %arg1, %c0_i32 : i32, i32, i32
  }
}

</mosaic_0001>

<llo_original>
// kernel: tpu_custom_call.1
$region0: #{tpu_custom_call.1}
  #allocation0 [shape = 'u32[]', space=smem, size = 0x4, offset = 0x4, fixed_abs, tag = 'smem constant byte address 0x4 - core index']
  #allocation1 [shape = 'u32[144,128]{1,0:T(1,128)}', space=vmem, size = 0x12000, scoped, tag = 'internal scratch']
  %s0 = inlined_call_operand.hbm [shape: f32[2,64,256], index: 0, kind: input, shape index: {}]
  %s1 = inlined_call_operand.hbm [shape: f32[64,64], index: 1, kind: input, shape index: {}]
  %s2 = inlined_call_operand.hbm [shape: f32[64,1], index: 2, kind: input, shape index: {}]
  %s3 = inlined_call_operand.hbm [shape: f32[64,25], index: 3, kind: input, shape index: {}]
  %s4 = inlined_call_operand.hbm [shape: f32[64,1], index: 4, kind: input, shape index: {}]
  %s5 = inlined_call_operand.hbm [shape: f32[25,1,256], index: 5, kind: input, shape index: {}]
  %s6 = inlined_call_operand.hbm [shape: f32[2,64,256], index: 6, kind: output, shape index: {}]
  %s7 = sld [smem:[#allocation0]]
  $region81: #{tpu_custom_call.1} parent=0
    _
  %s9 = ssub.s32 1, %s7
  %s10 = scalar_select 0, %s9, %s7
  $region1: #{tpu_custom_call.1} parent=0
    #allocation2 [shape = 'u8[131072]{0}', space=vmem, size = 0x20000, scoped, tag = 'input window, operand 0']
    #allocation3 [shape = 's32[2]{0}', space=sflag, size = 0x8, scoped, tag = 'scoped memory for tpu_custom_call.1']
    #allocation4 [shape = 's32[2]{0}', space=sflag, size = 0x8, scoped, tag = 'scoped memory for tpu_custom_call.1']
    #allocation5 [shape = 'u8[32768]{0}', space=vmem, size = 0x8000, scoped, tag = 'input window, operand 1, single buffered']
    #allocation6 [shape = 's32[1]{0}', space=sflag, size = 0x4, scoped, tag = 'scoped memory for tpu_custom_call.1']
    #allocation7 [shape = 'u8[32768]{0}', space=vmem, size = 0x8000, scoped, tag = 'input window, operand 2, single buffered']
    #allocation8 [shape = 'u8[32768]{0}', space=vmem, size = 0x8000, scoped, tag = 'input window, operand 3, single buffered']
    #allocation9 [shape = 's32[1]{0}', space=sflag, size = 0x4, scoped, tag = 'scoped memory for tpu_custom_call.1']
    #allocation10 [shape = 'u8[32768]{0}', space=vmem, size = 0x8000, scoped, tag = 'input window, operand 4, single buffered']
    #allocation11 [shape = 'u8[25600]{0}', space=vmem, size = 0x6400, scoped, tag = 'input window, operand 5, single buffered']
    #allocation12 [shape = 's32[1]{0}', space=sflag, size = 0x4, scoped, tag = 'scoped memory for tpu_custom_call.1']
    #allocation13 [shape = 'u8[65536]{0}', space=vmem, size = 0x10000, scoped, tag = 'output window, operand 0']
    %11 = vsyncpa [#allocation3], 0
    %s12 = scalar_lea.sflag [#allocation3], 1
    %13 = vsyncpa %s12, 0
    %14 = vsyncpa [#allocation6], 0
    %15 = vsyncpa [#allocation9], 0
    %16 = vsyncpa [#allocation12], 0
    %17 = vsyncpa [#allocation4], 0
    %s18 = scalar_lea.sflag [#allocation4], 1
    %19 = vsyncpa %s18, 0
    loop: start=0, step=1, limit=6
    $region2: #{tpu_custom_call.1} parent=1 // loop_pre_header
      _
    $region3: #{tpu_custom_call.1} parent=1 // loop_header
      %s21 = sphi 0, %s25
      %p22 = scmp.ge.s32.totalorder %s21, 6
      %s28 = sphi 0, %s40
      %s29 = sphi 0, %s36
      %s30 = sphi 0, %s28
      %s31 = sphi 0, %s29
      %s32 = sphi 0, %s30
      %s33 = sphi 0, %s31
      %s43 = sphi 0, %s45
      %s46 = sphi 0, %s43
      %s47 = sphi 0, %s46
      %s63 = sphi 0, %s47
      %s67 = sphi 0, %s67
      %s69 = sphi 0, %s67
      %s70 = sphi 0, %s69
      %s84 = sphi 0, %s70
      %s88 = sphi 0, %s88
      %s90 = sphi 0, %s88
      %s91 = sphi 0, %s90
      %s105 = sphi 0, %s91
      %s109 = sphi 0, %s109
      %s111 = sphi 0, %s109
      %s112 = sphi 0, %s111
      %s126 = sphi 0, %s112
      %s130 = sphi 0, %s130
      %s132 = sphi 0, %s130
      %s133 = sphi 0, %s132
      %s147 = sphi 0, %s133
      %s151 = sphi 0, %s151
      %s153 = sphi 0, %s151
      %s154 = sphi 0, %s153
      %s168 = sphi 0, %s154
      %s176 = sphi 0, %s178
      %s179 = sphi 0, %s176
      %s180 = sphi 0, %s179
      %s196 = sphi 0, %s180
    $region4: #{tpu_custom_call.1} parent=1 // loop_header_branch
      %24 = sbr.rel (%p22) target = $region8
    $region5: #{tpu_custom_call.1} parent=1 // loop_body
      %s26 = ssub.s32 %s21, 1
      %s27 = ssub.s32 %s21, 2
      %s34 = sadd.s32 1, %s29
      %p35 = scmp.ge.s32.totalorder %s34, 2
      %s36 = scalar_select %p35, 0, %s34
      %s37 = sadd.s32 1, %s28
      %s38 = scalar_select %p35, %s37, %s28
      %p39 = scmp.ge.s32.totalorder %s38, 2
      %s40 = scalar_select %p39, 0, %s38
      %s41 = ssub.s32 %s28, %s40
      %p42 = scmp.eq.s32.totalorder %s41, 0
      %s44 = sadd.s32 %s43, 1
      %s45 = scalar_select %p42, %s43, %s44
      %p48 = pneg %p42
      %p49 = scmp.eq.s32.totalorder %s21, 3
      %p50 = por %p48, %p49
      %p51 = scmp.ne.s32.totalorder %s43, %s46
      %p52 = scmp.eq.s32.totalorder %s21, 0
      %p53 = por %p51, %p52
      %p54 = scmp.ne.s32.totalorder %s43, %s46
      %p55 = scmp.eq.s32.totalorder %s26, 3
      %p56 = por %p54, %p55
      %p57 = scmp.ne.s32.totalorder %s46, %s47
      %p58 = scmp.eq.s32.totalorder %s26, 0
      %p59 = por %p57, %p58
      %p60 = scmp.ne.s32.totalorder %s46, %s47
      %p61 = scmp.eq.s32.totalorder %s27, 3
      %p62 = por %p60, %p61
      %p64 = scmp.ne.s32.totalorder %s47, %s63
      %p65 = scmp.eq.s32.totalorder %s27, 0
      %p66 = por %p64, %p65
      %s68 = sadd.s32 %s67, 1
      %p71 = scmp.eq.s32.totalorder %s21, 3
      %p72 = scmp.ne.s32.totalorder %s67, %s69
      %p73 = scmp.eq.s32.totalorder %s21, 0
      %p74 = por %p72, %p73
      %p75 = scmp.ne.s32.totalorder %s67, %s69
      %p76 = scmp.eq.s32.totalorder %s26, 3
      %p77 = por %p75, %p76
      %p78 = scmp.ne.s32.totalorder %s69, %s70
      %p79 = scmp.eq.s32.totalorder %s26, 0
      %p80 = por %p78, %p79
      %p81 = scmp.ne.s32.totalorder %s69, %s70
      %p82 = scmp.eq.s32.totalorder %s27, 3
      %p83 = por %p81, %p82
      %p85 = scmp.ne.s32.totalorder %s70, %s84
      %p86 = scmp.eq.s32.totalorder %s27, 0
      %p87 = por %p85, %p86
      %s89 = sadd.s32 %s88, 1
      %p92 = scmp.eq.s32.totalorder %s21, 3
      %p93 = scmp.ne.s32.totalorder %s88, %s90
      %p94 = scmp.eq.s32.totalorder %s21, 0
      %p95 = por %p93, %p94
      %p96 = scmp.ne.s32.totalorder %s88, %s90
      %p97 = scmp.eq.s32.totalorder %s26, 3
      %p98 = por %p96, %p97
      %p99 = scmp.ne.s32.totalorder %s90, %s91
      %p100 = scmp.eq.s32.totalorder %s26, 0
      %p101 = por %p99, %p100
      %p102 = scmp.ne.s32.totalorder %s90, %s91
      %p103 = scmp.eq.s32.totalorder %s27, 3
      %p104 = por %p102, %p103
      %p106 = scmp.ne.s32.totalorder %s91, %s105
      %p107 = scmp.eq.s32.totalorder %s27, 0
      %p108 = por %p106, %p107
      %s110 = sadd.s32 %s109, 1
      %p113 = scmp.eq.s32.totalorder %s21, 3
      %p114 = scmp.ne.s32.totalorder %s109, %s111
      %p115 = scmp.eq.s32.totalorder %s21, 0
      %p116 = por %p114, %p115
      %p117 = scmp.ne.s32.totalorder %s109, %s111
      %p118 = scmp.eq.s32.totalorder %s26, 3
      %p119 = por %p117, %p118
      %p120 = scmp.ne.s32.totalorder %s111, %s112
      %p121 = scmp.eq.s32.totalorder %s26, 0
      %p122 = por %p120, %p121
      %p123 = scmp.ne.s32.totalorder %s111, %s112
      %p124 = scmp.eq.s32.totalorder %s27, 3
      %p125 = por %p123, %p124
      %p127 = scmp.ne.s32.totalorder %s112, %s126
      %p128 = scmp.eq.s32.totalorder %s27, 0
      %p129 = por %p127, %p128
      %s131 = sadd.s32 %s130, 1
      %p134 = scmp.eq.s32.totalorder %s21, 3
      %p135 = scmp.ne.s32.totalorder %s130, %s132
      %p136 = scmp.eq.s32.totalorder %s21, 0
      %p137 = por %p135, %p136
      %p138 = scmp.ne.s32.totalorder %s130, %s132
      %p139 = scmp.eq.s32.totalorder %s26, 3
      %p140 = por %p138, %p139
      %p141 = scmp.ne.s32.totalorder %s132, %s133
      %p142 = scmp.eq.s32.totalorder %s26, 0
      %p143 = por %p141, %p142
      %p144 = scmp.ne.s32.totalorder %s132, %s133
      %p145 = scmp.eq.s32.totalorder %s27, 3
      %p146 = por %p144, %p145
      %p148 = scmp.ne.s32.totalorder %s133, %s147
      %p149 = scmp.eq.s32.totalorder %s27, 0
      %p150 = por %p148, %p149
      %s152 = sadd.s32 %s151, 1
      %p155 = scmp.eq.s32.totalorder %s21, 3
      %p156 = scmp.ne.s32.totalorder %s151, %s153
      %p157 = scmp.eq.s32.totalorder %s21, 0
      %p158 = por %p156, %p157
      %p159 = scmp.ne.s32.totalorder %s151, %s153
      %p160 = scmp.eq.s32.totalorder %s26, 3
      %p161 = por %p159, %p160
      %p162 = scmp.ne.s32.totalorder %s153, %s154
      %p163 = scmp.eq.s32.totalorder %s26, 0
      %p164 = por %p162, %p163
      %p165 = scmp.ne.s32.totalorder %s153, %s154
      %p166 = scmp.eq.s32.totalorder %s27, 3
      %p167 = por %p165, %p166
      %p169 = scmp.ne.s32.totalorder %s154, %s168
      %p170 = scmp.eq.s32.totalorder %s27, 0
      %p171 = por %p169, %p170
      %s172 = ssub.s32 %s28, %s40
      %s173 = ssub.s32 %s29, %s36
      %s174 = sor.u32 %s172, %s173
      %p175 = scmp.eq.s32.totalorder %s174, 0
      %s177 = sadd.s32 %s176, 1
      %s178 = scalar_select %p175, %s176, %s177
      %p181 = pneg %p175
      %p182 = scmp.eq.s32.totalorder %s21, 3
      %p183 = por %p181, %p182
      %p184 = scmp.ne.s32.totalorder %s176, %s179
      %p185 = scmp.eq.s32.totalorder %s21, 0
      %p186 = por %p184, %p185
      %p187 = scmp.ne.s32.totalorder %s176, %s179
      %p188 = scmp.eq.s32.totalorder %s26, 3
      %p189 = por %p187, %p188
      %p190 = scmp.ne.s32.totalorder %s179, %s180
      %p191 = scmp.eq.s32.totalorder %s26, 0
      %p192 = por %p190, %p191
      %p193 = scmp.ne.s32.totalorder %s179, %s180
      %p194 = scmp.eq.s32.totalorder %s27, 3
      %p195 = por %p193, %p194
      %p197 = scmp.ne.s32.totalorder %s180, %s196
      %p198 = scmp.eq.s32.totalorder %s27, 0
      %p199 = por %p197, %p198
      %p200 = scmp.le.s32.totalorder 1, %s21
      %p201 = scmp.lt.s32.totalorder %s21, 5
      %p202 = pnand %p200, %p201
      %p203 = pneg %p202
      // Predicated region
      $region9: #{tpu_custom_call.1} parent=5 // pred_check
        _
      $region10: #{tpu_custom_call.1} parent=5 // pred_check_branch
        %205 = sbr.rel (%p202) target = $region12
      $region11: #{tpu_custom_call.1} parent=5 // pred_region
        %s206 = ssub.s32 %s21, 1
        // Predicated region
        $region13: #{tpu_custom_call.1} parent=11 // pred_check
          %p207 = pneg %p80
        $region14: #{tpu_custom_call.1} parent=11 // pred_check_branch
          %209 = sbr.rel (%p207) target = $region16
        $region15: #{tpu_custom_call.1} parent=11 // pred_region
          %s211 = ssub.s32 1024, 1024
          %212 = vsyncadd [#allocation6], %s211
          %s213 = sshll.u32 [#allocation5], 4
          %s214 = int_to_ptr.vmem [resolvable:$true] %s213
          %219 = dma.hbm_to_vmem [thread:$0]  %s1, 1024, %s214, [#allocation6], 128, 128, 8
        $region16: #{tpu_custom_call.1} parent=11 // pred_fallthru
          _
        // Predicated region
        $region17: #{tpu_custom_call.1} parent=11 // pred_check
          %p220 = pneg %p101
        $region18: #{tpu_custom_call.1} parent=11 // pred_check_branch
          %222 = sbr.rel (%p220) target = $region20
        $region19: #{tpu_custom_call.1} parent=11 // pred_region
          %s224 = ssub.s32 1024, 1024
          %225 = vsyncadd [#allocation6], %s224
          %s226 = sshll.u32 [#allocation7], 4
          %s227 = int_to_ptr.vmem [resolvable:$true] %s226
          %232 = dma.hbm_to_vmem [thread:$0]  %s2, 1024, %s227, [#allocation6], 128, 128, 8
        $region20: #{tpu_custom_call.1} parent=11 // pred_fallthru
          _
        // Predicated region
        $region21: #{tpu_custom_call.1} parent=11 // pred_check
          %p233 = pneg %p122
        $region22: #{tpu_custom_call.1} parent=11 // pred_check_branch
          %235 = sbr.rel (%p233) target = $region24
        $region23: #{tpu_custom_call.1} parent=11 // pred_region
          %s237 = ssub.s32 1024, 1024
          %238 = vsyncadd [#allocation9], %s237
          %s239 = sshll.u32 [#allocation8], 4
          %s240 = int_to_ptr.vmem [resolvable:$true] %s239
          %245 = dma.hbm_to_vmem [thread:$0]  %s3, 1024, %s240, [#allocation9], 128, 128, 8
        $region24: #{tpu_custom_call.1} parent=11 // pred_fallthru
          _
        // Predicated region
        $region25: #{tpu_custom_call.1} parent=11 // pred_check
          %p246 = pneg %p143
        $region26: #{tpu_custom_call.1} parent=11 // pred_check_branch
          %248 = sbr.rel (%p246) target = $region28
        $region27: #{tpu_custom_call.1} parent=11 // pred_region
          %s250 = ssub.s32 1024, 1024
          %251 = vsyncadd [#allocation9], %s250
          %s252 = sshll.u32 [#allocation10], 4
          %s253 = int_to_ptr.vmem [resolvable:$true] %s252
          %258 = dma.hbm_to_vmem [thread:$0]  %s4, 1024, %s253, [#allocation9], 128, 128, 8
        $region28: #{tpu_custom_call.1} parent=11 // pred_fallthru
          _
        // Predicated region
        $region29: #{tpu_custom_call.1} parent=11 // pred_check
          %p259 = pneg %p164
        $region30: #{tpu_custom_call.1} parent=11 // pred_check_branch
          %261 = sbr.rel (%p259) target = $region32
        $region31: #{tpu_custom_call.1} parent=11 // pred_region
          %s263 = ssub.s32 800, 800
          %264 = vsyncadd [#allocation12], %s263
          %s265 = sshll.u32 [#allocation11], 4
          %s266 = int_to_ptr.vmem [resolvable:$true] %s265
          %271 = dma.hbm_to_vmem [thread:$0]  %s5, 800, %s266, [#allocation12], 32, 32, 2
        $region32: #{tpu_custom_call.1} parent=11 // pred_fallthru
          _
      $region12: #{tpu_custom_call.1} parent=5 // pred_fallthru
        _
      %p272 = scmp.lt.s32.totalorder %s21, 4
      // Predicated region
      $region33: #{tpu_custom_call.1} parent=5 // pred_check
        %p273 = pneg %p272
      $region34: #{tpu_custom_call.1} parent=5 // pred_check_branch
        %275 = sbr.rel (%p273) target = $region36
      $region35: #{tpu_custom_call.1} parent=5 // pred_region
        // Predicated region
        $region37: #{tpu_custom_call.1} parent=35 // pred_check
          %p276 = pneg %p53
        $region38: #{tpu_custom_call.1} parent=35 // pred_check_branch
          %278 = sbr.rel (%p276) target = $region40
        $region39: #{tpu_custom_call.1} parent=35 // pred_region
          %s279 = sand.u32 %s43, 1
          %s280 = scalar_lea.sflag [#allocation3], %s279
          %s281 = sand.u32 %s43, 1
          %s282 = smul.addr %s281, 128
          %s283 = scalar_lea.vmem [#allocation2], %s282
          %s285 = ssub.s32 2048, 2048
          %286 = vsyncadd %s280, %s285
          %s287 = smul.addr %s28, 16
          %s288 = smul.addr %s287, 128
          %s289 = scalar_lea.hbm %s0, %s288
          %s290 = sshll.u32 %s283, 4
          %s291 = int_to_ptr.vmem [resolvable:$true] %s290
          %296 = dma.hbm_to_vmem [thread:$0]  %s289, 2048, %s291, %s280, 256, 256, 16
        $region40: #{tpu_custom_call.1} parent=35 // pred_fallthru
          _
      $region36: #{tpu_custom_call.1} parent=5 // pred_fallthru
        _
      %p297 = scmp.le.s32.totalorder 1, %s21
      %p298 = scmp.lt.s32.totalorder %s21, 5
      %p299 = pnand %p297, %p298
      %p300 = pneg %p299
      // Predicated region
      $region41: #{tpu_custom_call.1} parent=5 // pred_check
        _
      $region42: #{tpu_custom_call.1} parent=5 // pred_check_branch
        %302 = sbr.rel (%p299) target = $region44
      $region43: #{tpu_custom_call.1} parent=5 // pred_region
        %s303 = ssub.s32 %s21, 1
        %s304 = sand.u32 %s46, 1
        %s305 = scalar_lea.sflag [#allocation3], %s304
        %s306 = sand.u32 %s46, 1
        %s307 = smul.addr %s306, 128
        %s308 = scalar_lea.vmem [#allocation2], %s307
        // Predicated region
        $region45: #{tpu_custom_call.1} parent=43 // pred_check
          %p309 = pneg %p59
        $region46: #{tpu_custom_call.1} parent=43 // pred_check_branch
          %311 = sbr.rel (%p309) target = $region48
        $region47: #{tpu_custom_call.1} parent=43 // pred_region
          %312 = dma.done %s305, 2048
        $region48: #{tpu_custom_call.1} parent=43 // pred_fallthru
          _
        // Predicated region
        $region49: #{tpu_custom_call.1} parent=43 // pred_check
          %p313 = pneg %p80
        $region50: #{tpu_custom_call.1} parent=43 // pred_check_branch
          %315 = sbr.rel (%p313) target = $region52
        $region51: #{tpu_custom_call.1} parent=43 // pred_region
          %316 = dma.done [#allocation6], 1024
        $region52: #{tpu_custom_call.1} parent=43 // pred_fallthru
          _
        // Predicated region
        $region53: #{tpu_custom_call.1} parent=43 // pred_check
          %p317 = pneg %p101
        $region54: #{tpu_custom_call.1} parent=43 // pred_check_branch
          %319 = sbr.rel (%p317) target = $region56
        $region55: #{tpu_custom_call.1} parent=43 // pred_region
          %320 = dma.done [#allocation6], 1024
        $region56: #{tpu_custom_call.1} parent=43 // pred_fallthru
          _
        // Predicated region
        $region57: #{tpu_custom_call.1} parent=43 // pred_check
          %p321 = pneg %p122
        $region58: #{tpu_custom_call.1} parent=43 // pred_check_branch
          %323 = sbr.rel (%p321) target = $region60
        $region59: #{tpu_custom_call.1} parent=43 // pred_region
          %324 = dma.done [#allocation9], 1024
        $region60: #{tpu_custom_call.1} parent=43 // pred_fallthru
          _
        // Predicated region
        $region61: #{tpu_custom_call.1} parent=43 // pred_check
          %p325 = pneg %p143
        $region62: #{tpu_custom_call.1} parent=43 // pred_check_branch
          %327 = sbr.rel (%p325) target = $region64
        $region63: #{tpu_custom_call.1} parent=43 // pred_region
          %328 = dma.done [#allocation9], 1024
        $region64: #{tpu_custom_call.1} parent=43 // pred_fallthru
          _
        // Predicated region
        $region65: #{tpu_custom_call.1} parent=43 // pred_check
          %p329 = pneg %p164
        $region66: #{tpu_custom_call.1} parent=43 // pred_check_branch
          %331 = sbr.rel (%p329) target = $region68
        $region67: #{tpu_custom_call.1} parent=43 // pred_region
          %332 = dma.done [#allocation12], 800
        $region68: #{tpu_custom_call.1} parent=43 // pred_fallthru
          _
        %s333 = sand.u32 %s46, 1
        %s334 = scalar_lea.sflag [#allocation3], %s333
        %s335 = sand.u32 %s46, 1
        %s336 = smul.addr %s335, 128
        %s337 = scalar_lea.vmem [#allocation2], %s336
        %p338 = pneg %p59
        %p339 = pneg %p56
        %p340 = pneg %p80
        %p341 = pneg %p77
        %p342 = pneg %p101
        %p343 = pneg %p98
        %p344 = pneg %p122
        %p345 = pneg %p119
        %p346 = pneg %p143
        %p347 = pneg %p140
        %p348 = pneg %p164
        %p349 = pneg %p161
        %p350 = pneg %p192
        %p351 = pneg %p189
        %s352 = sand.u32 %s179, 1
        %s353 = scalar_lea.sflag [#allocation4], %s352
        %s354 = sand.u32 %s179, 1
        %s355 = smul.addr %s354, 64
        %s356 = scalar_lea.vmem [#allocation13], %s355
        %s357 = smul.u32 4, %s31
        %s358 = smul.u32 %s31, 32
        %v359 = vld [vmem:[%s308] sm:$0xff]
        %v360 = vld [vmem:[%s308 + $0x8] sm:$0xff]
        %v361 = vld [vmem:[%s308 + $0x10] sm:$0xff]
        %v362 = vld [vmem:[%s308 + $0x18] sm:$0xff]
        %v363 = vld [vmem:[%s308 + $0x20] sm:$0xff]
        %v364 = vld [vmem:[%s308 + $0x28] sm:$0xff]
        %v365 = vld [vmem:[%s308 + $0x30] sm:$0xff]
        %v366 = vld [vmem:[%s308 + $0x38] sm:$0xff]
        %v367 = vld [vmem:[%s308 + $0x40] sm:$0xff]
        %v368 = vld [vmem:[%s308 + $0x48] sm:$0xff]
        %v369 = vld [vmem:[%s308 + $0x50] sm:$0xff]
        %v370 = vld [vmem:[%s308 + $0x58] sm:$0xff]
        %v371 = vld [vmem:[%s308 + $0x60] sm:$0xff]
        %v372 = vld [vmem:[%s308 + $0x68] sm:$0xff]
        %v373 = vld [vmem:[%s308 + $0x70] sm:$0xff]
        %v374 = vld [vmem:[%s308 + $0x78] sm:$0xff]
        %s375 = scalar_lea.vmem [#allocation5], %s358
        %v376 = vld [vmem:[%s375] sm:$0xff]
        %v377 = vld [vmem:[%s375 + $0x8] sm:$0xff]
        %v378 = vld [vmem:[%s375 + $0x10] sm:$0xff]
        %v379 = vld [vmem:[%s375 + $0x18] sm:$0xff]
        %s380 = scalar_lea.vmem [#allocation7], %s358
        %v381 = vld [vmem:[%s380] sm:$0xff]
        %v382 = vld [vmem:[%s380 + $0x8] sm:$0xff]
        %v383 = vld [vmem:[%s380 + $0x10] sm:$0xff]
        %v384 = vld [vmem:[%s380 + $0x18] sm:$0xff]
        %386 = vset.pattern.permute.xlu0 0
        %387 = vperm.xlu0 %386, %v381
        %v388 = vpop.permute.xlu0 %387
        %391 = vset.pattern.permute.xlu0 0
        %392 = vperm.xlu0 %391, %v382
        %v393 = vpop.permute.xlu0 %392
        %396 = vset.pattern.permute.xlu0 0
        %397 = vperm.xlu0 %396, %v383
        %v398 = vpop.permute.xlu0 %397
        %401 = vset.pattern.permute.xlu0 0
        %402 = vperm.xlu0 %401, %v384
        %v403 = vpop.permute.xlu0 %402
        %vm405 = vcmask 523264
        %v407 = vsel %vm405, %v376, 0
        %v410 = vsel %vm405, %v377, 0
        %v413 = vsel %vm405, %v378, 0
        %v416 = vsel %vm405, %v379, 0
        %418 = vmatprep.subr.mxu0 %v360
        %419 = vmatpush1.msra.mxu0 %v359
        %420 = vmatprep.subr.mxu0 %v362
        %421 = vmatpush1.msra.mxu0 %v361
        %422 = vmatprep.subr.mxu0 %v364
        %423 = vmatpush1.msra.mxu0 %v363
        %424 = vmatprep.subr.mxu0 %v366
        %425 = vmatpush1.msra.mxu0 %v365
        %426 = vmatprep.subr.mxu0 %v368
        %427 = vmatpush1.msra.mxu0 %v367
        %428 = vmatprep.subr.mxu0 %v370
        %429 = vmatpush1.msra.mxu0 %v369
        %430 = vmatprep.subr.mxu0 %v372
        %431 = vmatpush1.msra.mxu0 %v371
        %432 = vmatprep.subr.mxu0 %v374
        %433 = vmatpush1.msra.mxu0 %v373
        %434 = vmatprep.subr.mxu0 0.0
        %435 = vmatpush1.msra.mxu0 0.0
        %436 = vmatprep.subr.mxu0 0.0
        %437 = vmatpush1.msra.mxu0 0.0
        %438 = vmatprep.subr.mxu0 0.0
        %439 = vmatpush1.msra.mxu0 0.0
        %440 = vmatprep.subr.mxu0 0.0
        %441 = vmatpush1.msra.mxu0 0.0
        %442 = vmatprep.subr.mxu0 0.0
        %443 = vmatpush1.msra.mxu0 0.0
        %444 = vmatprep.subr.mxu0 0.0
        %445 = vmatpush1.msra.mxu0 0.0
        %446 = vmatprep.subr.mxu0 0.0
        %447 = vmatpush1.msra.mxu0 0.0
        %448 = vmatprep.subr.mxu0 0.0
        %449 = vmatpush1.msra.mxu0 0.0
        %450 = vmatprep.subr.mxu0 0.0
        %451 = vmatpush1.msra.mxu0 0.0
        %452 = vmatprep.subr.mxu0 0.0
        %453 = vmatpush1.msra.mxu0 0.0
        %454 = vmatprep.subr.mxu0 0.0
        %455 = vmatpush1.msra.mxu0 0.0
        %456 = vmatprep.subr.mxu0 0.0
        %457 = vmatpush1.msra.mxu0 0.0
        %458 = vmatprep.subr.mxu0 0.0
        %459 = vmatpush1.msra.mxu0 0.0
        %460 = vmatprep.subr.mxu0 0.0
        %461 = vmatpush1.msra.mxu0 0.0
        %462 = vmatprep.subr.mxu0 0.0
        %463 = vmatpush1.msra.mxu0 0.0
        %464 = vmatprep.subr.mxu0 0.0
        %465 = vmatpush1.msra.mxu0 0.0
        %466 = vmatprep.subr.mxu0 0.0
        %467 = vmatpush1.msra.mxu0 0.0
        %468 = vmatprep.subr.mxu0 0.0
        %469 = vmatpush1.msra.mxu0 0.0
        %470 = vmatprep.subr.mxu0 0.0
        %471 = vmatpush1.msra.mxu0 0.0
        %472 = vmatprep.subr.mxu0 0.0
        %473 = vmatpush1.msra.mxu0 0.0
        %474 = vmatprep.subr.mxu0 0.0
        %475 = vmatpush1.msra.mxu0 0.0
        %476 = vmatprep.subr.mxu0 0.0
        %477 = vmatpush1.msra.mxu0 0.0
        %478 = vmatprep.subr.mxu0 0.0
        %479 = vmatpush1.msra.mxu0 0.0
        %480 = vmatprep.subr.mxu0 0.0
        %481 = vmatpush1.msra.mxu0 0.0
        %482 = vmatprep.mubr.f32.mxu0 0.0
        %483 = vmatmul.mubr.f32.gmra.mrb[0].mxu0 %v407
        %v484 = vpop.f32.mrb[0].mxu0
        %v485 = vadd.f32 %v388, %v484
        %v486 = vpop.f32.mrb[0].mxu0
        %v487 = vadd.f32 %v388, %v486
        %488 = vmatprep.mubr.f32.mxu0 0.0
        %489 = vmatmul.mubr.f32.gmra.mrb[0].mxu0 %v410
        %v490 = vpop.f32.mrb[0].mxu0
        %v491 = vadd.f32 %v393, %v490
        %v492 = vpop.f32.mrb[0].mxu0
        %v493 = vadd.f32 %v393, %v492
        %494 = vmatprep.mubr.f32.mxu0 0.0
        %495 = vmatmul.mubr.f32.gmra.mrb[0].mxu0 %v413
        %v496 = vpop.f32.mrb[0].mxu0
        %v497 = vadd.f32 %v398, %v496
        %v498 = vpop.f32.mrb[0].mxu0
        %v499 = vadd.f32 %v398, %v498
        %500 = vmatprep.mubr.f32.mxu0 0.0
        %501 = vmatmul.mubr.f32.gmra.mrb[0].mxu0 %v416
        %v502 = vpop.f32.mrb[0].mxu0
        %v503 = vadd.f32 %v403, %v502
        %v504 = vpop.f32.mrb[0].mxu0
        %v505 = vadd.f32 %v403, %v504
        %506 = vdwg.mxu0
        %v507 = vmax.f32 %v485, 0.0
        %v508 = vmax.f32 %v487, 0.0
        %v509 = vmax.f32 %v491, 0.0
        %v510 = vmax.f32 %v493, 0.0
        %v511 = vmax.f32 %v497, 0.0
        %v512 = vmax.f32 %v499, 0.0
        %v513 = vmax.f32 %v503, 0.0
        %v514 = vmax.f32 %v505, 0.0
        %s515 = scalar_lea.vmem [#allocation8], %s358
        %v516 = vld [vmem:[%s515] sm:$0xff]
        %v517 = vld [vmem:[%s515 + $0x8] sm:$0xff]
        %v518 = vld [vmem:[%s515 + $0x10] sm:$0xff]
        %v519 = vld [vmem:[%s515 + $0x18] sm:$0xff]
        %520 = vrot.lane.b32.xlu0 %v507, 32
        %v521 = vpop.permute.xlu0 %520
        %522 = vrot.lane.b32.xlu0 %v509, 32
        %v523 = vpop.permute.xlu0 %522
        %524 = vrot.lane.b32.xlu0 %v511, 32
        %v525 = vpop.permute.xlu0 %524
        %526 = vrot.lane.b32.xlu0 %v513, 32
        %v527 = vpop.permute.xlu0 %526
        %528 = vrot.lane.b32.xlu0 %v508, 32
        %v529 = vpop.permute.xlu0 %528
        %530 = vrot.lane.b32.xlu0 %v510, 32
        %v531 = vpop.permute.xlu0 %530
        %532 = vrot.lane.b32.xlu0 %v512, 32
        %v533 = vpop.permute.xlu0 %532
        %534 = vrot.lane.b32.xlu0 %v514, 32
        %v535 = vpop.permute.xlu0 %534
        %v536 = vlaneseq
        %v537 = vand.u32 %v536, 127
        %vm538 = vcmp.lt.s32.totalorder %v537, 32
        %v539 = vsel %vm538, %v521, %v529
        %v540 = vsel %vm538, %v523, %v531
        %v541 = vsel %vm538, %v525, %v533
        %v542 = vsel %vm538, %v527, %v535
        %v543 = vsel %vm538, %v529, %v521
        %v544 = vsel %vm538, %v531, %v523
        %v545 = vsel %vm538, %v533, %v525
        %v546 = vsel %vm538, %v535, %v527
        %547 = vrot.lane.b32.xlu0 %v543, 2
        %v548 = vpop.permute.xlu0 %547
        %549 = vrot.lane.b32.xlu0 %v544, 2
        %v550 = vpop.permute.xlu0 %549
        %551 = vrot.lane.b32.xlu0 %v545, 2
        %v552 = vpop.permute.xlu0 %551
        %553 = vrot.lane.b32.xlu0 %v546, 2
        %v554 = vpop.permute.xlu0 %553
        %555 = vrot.lane.b32.xlu0 %v539, 2
        %v556 = vpop.permute.xlu0 %555
        %557 = vrot.lane.b32.xlu0 %v540, 2
        %v558 = vpop.permute.xlu0 %557
        %559 = vrot.lane.b32.xlu0 %v541, 2
        %v560 = vpop.permute.xlu0 %559
        %561 = vrot.lane.b32.xlu0 %v542, 2
        %v562 = vpop.permute.xlu0 %561
        %vm563 = vcmp.lt.s32.totalorder %v537, 2
        %v564 = vsel %vm563, %v548, %v556
        %v565 = vsel %vm563, %v550, %v558
        %v566 = vsel %vm563, %v552, %v560
        %v567 = vsel %vm563, %v554, %v562
        %v568 = vsel %vm563, %v556, %v548
        %v569 = vsel %vm563, %v558, %v550
        %v570 = vsel %vm563, %v560, %v552
        %v571 = vsel %vm563, %v562, %v554
        %v572 = vld [vmem:[#allocation11] sm:$0x3]
        %v574 = vlaneseq
        %v575 = vshrl.u32 %v574, 7
        %v576 = vsub.s32 0, %v575
        %v577 = vrot.slane %v572, %v576
        %v578 = vlaneseq
        %v579 = vshrl.u32 %v578, 7
        %v580 = vsub.s32 1, %v579
        %v581 = vrot.slane %v572, %v580
        %v584 = vmul.f32 %v568, %v577
        %v585 = vmul.f32 %v564, %v581
        %v586 = vmul.f32 %v569, %v577
        %v587 = vmul.f32 %v565, %v581
        %v588 = vmul.f32 %v570, %v577
        %v589 = vmul.f32 %v566, %v581
        %v590 = vmul.f32 %v571, %v577
        %v591 = vmul.f32 %v567, %v581
        %593 = vset.pattern.permute.xlu0 0
        %594 = vperm.xlu0 %593, %v516
        %v595 = vpop.permute.xlu0 %594
        %598 = vset.pattern.permute.xlu0 0
        %599 = vperm.xlu0 %598, %v517
        %v600 = vpop.permute.xlu0 %599
        %603 = vset.pattern.permute.xlu0 0
        %604 = vperm.xlu0 %603, %v518
        %v605 = vpop.permute.xlu0 %604
        %608 = vset.pattern.permute.xlu0 0
        %609 = vperm.xlu0 %608, %v519
        %v610 = vpop.permute.xlu0 %609
        %v612 = vmul.f32 %v584, %v595
        %v613 = vmul.f32 %v585, %v595
        %v614 = vmul.f32 %v586, %v600
        %v615 = vmul.f32 %v587, %v600
        %v616 = vmul.f32 %v588, %v605
        %v617 = vmul.f32 %v589, %v605
        %v618 = vmul.f32 %v590, %v610
        %v619 = vmul.f32 %v591, %v610
        %v620 = vadd.f32 %v612, 0.0
        %v621 = vadd.f32 %v613, 0.0
        %v622 = vadd.f32 %v614, 0.0
        %v623 = vadd.f32 %v615, 0.0
        %v624 = vadd.f32 %v616, 0.0
        %v625 = vadd.f32 %v617, 0.0
        %v626 = vadd.f32 %v618, 0.0
        %v627 = vadd.f32 %v619, 0.0
        %628 = vrot.lane.b32.xlu0 %v543, 1
        %v629 = vpop.permute.xlu0 %628
        %630 = vrot.lane.b32.xlu0 %v544, 1
        %v631 = vpop.permute.xlu0 %630
        %632 = vrot.lane.b32.xlu0 %v545, 1
        %v633 = vpop.permute.xlu0 %632
        %634 = vrot.lane.b32.xlu0 %v546, 1
        %v635 = vpop.permute.xlu0 %634
        %636 = vrot.lane.b32.xlu0 %v539, 1
        %v637 = vpop.permute.xlu0 %636
        %638 = vrot.lane.b32.xlu0 %v540, 1
        %v639 = vpop.permute.xlu0 %638
        %640 = vrot.lane.b32.xlu0 %v541, 1
        %v641 = vpop.permute.xlu0 %640
        %642 = vrot.lane.b32.xlu0 %v542, 1
        %v643 = vpop.permute.xlu0 %642
        %vm644 = vcmp.lt.s32.totalorder %v537, 1
        %v645 = vsel %vm644, %v629, %v637
        %v646 = vsel %vm644, %v631, %v639
        %v647 = vsel %vm644, %v633, %v641
        %v648 = vsel %vm644, %v635, %v643
        %v649 = vsel %vm644, %v637, %v629
        %v650 = vsel %vm644, %v639, %v631
        %v651 = vsel %vm644, %v641, %v633
        %v652 = vsel %vm644, %v643, %v635
        %s653 = scalar_lea.vmem [#allocation11], 2
        %v654 = vld [vmem:[%s653] sm:$0x3]
        %v656 = vlaneseq
        %v657 = vshrl.u32 %v656, 7
        %v658 = vsub.s32 0, %v657
        %v659 = vrot.slane %v654, %v658
        %v660 = vlaneseq
        %v661 = vshrl.u32 %v660, 7
        %v662 = vsub.s32 1, %v661
        %v663 = vrot.slane %v654, %v662
        %v666 = vmul.f32 %v649, %v659
        %v667 = vmul.f32 %v645, %v663
        %v668 = vmul.f32 %v650, %v659
        %v669 = vmul.f32 %v646, %v663
        %v670 = vmul.f32 %v651, %v659
        %v671 = vmul.f32 %v647, %v663
        %v672 = vmul.f32 %v652, %v659
        %v673 = vmul.f32 %v648, %v663
        %674 = vset.pattern.permute.xlu0 1
        %675 = vperm.xlu0 %674, %v516
        %v676 = vpop.permute.xlu0 %675
        %678 = vset.pattern.permute.xlu0 1
        %679 = vperm.xlu0 %678, %v517
        %v680 = vpop.permute.xlu0 %679
        %682 = vset.pattern.permute.xlu0 1
        %683 = vperm.xlu0 %682, %v518
        %v684 = vpop.permute.xlu0 %683
        %686 = vset.pattern.permute.xlu0 1
        %687 = vperm.xlu0 %686, %v519
        %v688 = vpop.permute.xlu0 %687
        %v690 = vmul.f32 %v666, %v676
        %v691 = vmul.f32 %v667, %v676
        %v692 = vmul.f32 %v668, %v680
        %v693 = vmul.f32 %v669, %v680
        %v694 = vmul.f32 %v670, %v684
        %v695 = vmul.f32 %v671, %v684
        %v696 = vmul.f32 %v672, %v688
        %v697 = vmul.f32 %v673, %v688
        %v698 = vadd.f32 %v620, %v690
        %v699 = vadd.f32 %v621, %v691
        %v700 = vadd.f32 %v622, %v692
        %v701 = vadd.f32 %v623, %v693
        %v702 = vadd.f32 %v624, %v694
        %v703 = vadd.f32 %v625, %v695
        %v704 = vadd.f32 %v626, %v696
        %v705 = vadd.f32 %v627, %v697
        %s706 = scalar_lea.vmem [#allocation11], 4
        %v707 = vld [vmem:[%s706] sm:$0x3]
        %v709 = vlaneseq
        %v710 = vshrl.u32 %v709, 7
        %v711 = vsub.s32 0, %v710
        %v712 = vrot.slane %v707, %v711
        %v713 = vlaneseq
        %v714 = vshrl.u32 %v713, 7
        %v715 = vsub.s32 1, %v714
        %v716 = vrot.slane %v707, %v715
        %v719 = vmul.f32 %v543, %v712
        %v720 = vmul.f32 %v539, %v716
        %v721 = vmul.f32 %v544, %v712
        %v722 = vmul.f32 %v540, %v716
        %v723 = vmul.f32 %v545, %v712
        %v724 = vmul.f32 %v541, %v716
        %v725 = vmul.f32 %v546, %v712
        %v726 = vmul.f32 %v542, %v716
        %727 = vset.pattern.permute.xlu0 2
        %728 = vperm.xlu0 %727, %v516
        %v729 = vpop.permute.xlu0 %728
        %731 = vset.pattern.permute.xlu0 2
        %732 = vperm.xlu0 %731, %v517
        %v733 = vpop.permute.xlu0 %732
        %735 = vset.pattern.permute.xlu0 2
        %736 = vperm.xlu0 %735, %v518
        %v737 = vpop.permute.xlu0 %736
        %739 = vset.pattern.permute.xlu0 2
        %740 = vperm.xlu0 %739, %v519
        %v741 = vpop.permute.xlu0 %740
        %v743 = vmul.f32 %v719, %v729
        %v744 = vmul.f32 %v720, %v729
        %v745 = vmul.f32 %v721, %v733
        %v746 = vmul.f32 %v722, %v733
        %v747 = vmul.f32 %v723, %v737
        %v748 = vmul.f32 %v724, %v737
        %v749 = vmul.f32 %v725, %v741
        %v750 = vmul.f32 %v726, %v741
        %v751 = vadd.f32 %v698, %v743
        %v752 = vadd.f32 %v699, %v744
        %v753 = vadd.f32 %v700, %v745
        %v754 = vadd.f32 %v701, %v746
        %v755 = vadd.f32 %v702, %v747
        %v756 = vadd.f32 %v703, %v748
        %v757 = vadd.f32 %v704, %v749
        %v758 = vadd.f32 %v705, %v750
        %759 = vrot.lane.b32.xlu0 %v543, 127
        %v760 = vpop.permute.xlu0 %759
        %761 = vrot.lane.b32.xlu0 %v544, 127
        %v762 = vpop.permute.xlu0 %761
        %763 = vrot.lane.b32.xlu0 %v545, 127
        %v764 = vpop.permute.xlu0 %763
        %765 = vrot.lane.b32.xlu0 %v546, 127
        %v766 = vpop.permute.xlu0 %765
        %767 = vrot.lane.b32.xlu0 %v539, 127
        %v768 = vpop.permute.xlu0 %767
        %769 = vrot.lane.b32.xlu0 %v540, 127
        %v770 = vpop.permute.xlu0 %769
        %771 = vrot.lane.b32.xlu0 %v541, 127
        %v772 = vpop.permute.xlu0 %771
        %773 = vrot.lane.b32.xlu0 %v542, 127
        %v774 = vpop.permute.xlu0 %773
        %vm775 = vcmp.lt.s32.totalorder %v537, 127
        %v776 = vsel %vm775, %v760, %v768
        %v777 = vsel %vm775, %v762, %v770
        %v778 = vsel %vm775, %v764, %v772
        %v779 = vsel %vm775, %v766, %v774
        %v780 = vsel %vm775, %v768, %v760
        %v781 = vsel %vm775, %v770, %v762
        %v782 = vsel %vm775, %v772, %v764
        %v783 = vsel %vm775, %v774, %v766
        %s784 = scalar_lea.vmem [#allocation11], 6
        %v785 = vld [vmem:[%s784] sm:$0x3]
        %v787 = vlaneseq
        %v788 = vshrl.u32 %v787, 7
        %v789 = vsub.s32 0, %v788
        %v790 = vrot.slane %v785, %v789
        %v791 = vlaneseq
        %v792 = vshrl.u32 %v791, 7
        %v793 = vsub.s32 1, %v792
        %v794 = vrot.slane %v785, %v793
        %v797 = vmul.f32 %v776, %v790
        %v798 = vmul.f32 %v780, %v794
        %v799 = vmul.f32 %v777, %v790
        %v800 = vmul.f32 %v781, %v794
        %v801 = vmul.f32 %v778, %v790
        %v802 = vmul.f32 %v782, %v794
        %v803 = vmul.f32 %v779, %v790
        %v804 = vmul.f32 %v783, %v794
        %805 = vset.pattern.permute.xlu0 3
        %806 = vperm.xlu0 %805, %v516
        %v807 = vpop.permute.xlu0 %806
        %809 = vset.pattern.permute.xlu0 3
        %810 = vperm.xlu0 %809, %v517
        %v811 = vpop.permute.xlu0 %810
        %813 = vset.pattern.permute.xlu0 3
        %814 = vperm.xlu0 %813, %v518
        %v815 = vpop.permute.xlu0 %814
        %817 = vset.pattern.permute.xlu0 3
        %818 = vperm.xlu0 %817, %v519
        %v819 = vpop.permute.xlu0 %818
        %v821 = vmul.f32 %v797, %v807
        %v822 = vmul.f32 %v798, %v807
        %v823 = vmul.f32 %v799, %v811
        %v824 = vmul.f32 %v800, %v811
        %v825 = vmul.f32 %v801, %v815
        %v826 = vmul.f32 %v802, %v815
        %v827 = vmul.f32 %v803, %v819
        %v828 = vmul.f32 %v804, %v819
        %v829 = vadd.f32 %v751, %v821
        %v830 = vadd.f32 %v752, %v822
        %v831 = vadd.f32 %v753, %v823
        %v832 = vadd.f32 %v754, %v824
        %v833 = vadd.f32 %v755, %v825
        %v834 = vadd.f32 %v756, %v826
        %v835 = vadd.f32 %v757, %v827
        %v836 = vadd.f32 %v758, %v828
        %837 = vrot.lane.b32.xlu0 %v543, 126
        %v838 = vpop.permute.xlu0 %837
        %839 = vrot.lane.b32.xlu0 %v544, 126
        %v840 = vpop.permute.xlu0 %839
        %841 = vrot.lane.b32.xlu0 %v545, 126
        %v842 = vpop.permute.xlu0 %841
        %843 = vrot.lane.b32.xlu0 %v546, 126
        %v844 = vpop.permute.xlu0 %843
        %845 = vrot.lane.b32.xlu0 %v539, 126
        %v846 = vpop.permute.xlu0 %845
        %847 = vrot.lane.b32.xlu0 %v540, 126
        %v848 = vpop.permute.xlu0 %847
        %849 = vrot.lane.b32.xlu0 %v541, 126
        %v850 = vpop.permute.xlu0 %849
        %851 = vrot.lane.b32.xlu0 %v542, 126
        %v852 = vpop.permute.xlu0 %851
        %vm853 = vcmp.lt.s32.totalorder %v537, 126
        %v854 = vsel %vm853, %v838, %v846
        %v855 = vsel %vm853, %v840, %v848
        %v856 = vsel %vm853, %v842, %v850
        %v857 = vsel %vm853, %v844, %v852
        %v858 = vsel %vm853, %v846, %v838
        %v859 = vsel %vm853, %v848, %v840
        %v860 = vsel %vm853, %v850, %v842
        %v861 = vsel %vm853, %v852, %v844
        %s862 = scalar_lea.vmem [#allocation11], 8
        %v863 = vld [vmem:[%s862] sm:$0x3]
        %v865 = vlaneseq
        %v866 = vshrl.u32 %v865, 7
        %v867 = vsub.s32 0, %v866
        %v868 = vrot.slane %v863, %v867
        %v869 = vlaneseq
        %v870 = vshrl.u32 %v869, 7
        %v871 = vsub.s32 1, %v870
        %v872 = vrot.slane %v863, %v871
        %v875 = vmul.f32 %v854, %v868
        %v876 = vmul.f32 %v858, %v872
        %v877 = vmul.f32 %v855, %v868
        %v878 = vmul.f32 %v859, %v872
        %v879 = vmul.f32 %v856, %v868
        %v880 = vmul.f32 %v860, %v872
        %v881 = vmul.f32 %v857, %v868
        %v882 = vmul.f32 %v861, %v872
        %883 = vset.pattern.permute.xlu0 4
        %884 = vperm.xlu0 %883, %v516
        %v885 = vpop.permute.xlu0 %884
        %887 = vset.pattern.permute.xlu0 4
        %888 = vperm.xlu0 %887, %v517
        %v889 = vpop.permute.xlu0 %888
        %891 = vset.pattern.permute.xlu0 4
        %892 = vperm.xlu0 %891, %v518
        %v893 = vpop.permute.xlu0 %892
        %895 = vset.pattern.permute.xlu0 4
        %896 = vperm.xlu0 %895, %v519
        %v897 = vpop.permute.xlu0 %896
        %v899 = vmul.f32 %v875, %v885
        %v900 = vmul.f32 %v876, %v885
        %v901 = vmul.f32 %v877, %v889
        %v902 = vmul.f32 %v878, %v889
        %v903 = vmul.f32 %v879, %v893
        %v904 = vmul.f32 %v880, %v893
        %v905 = vmul.f32 %v881, %v897
        %v906 = vmul.f32 %v882, %v897
        %v907 = vadd.f32 %v829, %v899
        %v908 = vadd.f32 %v830, %v900
        %v909 = vadd.f32 %v831, %v901
        %v910 = vadd.f32 %v832, %v902
        %v911 = vadd.f32 %v833, %v903
        %v912 = vadd.f32 %v834, %v904
        %v913 = vadd.f32 %v835, %v905
        %v914 = vadd.f32 %v836, %v906
        %915 = vrot.lane.b32.xlu0 %v507, 16
        %v916 = vpop.permute.xlu0 %915
        %917 = vrot.lane.b32.xlu0 %v509, 16
        %v918 = vpop.permute.xlu0 %917
        %919 = vrot.lane.b32.xlu0 %v511, 16
        %v920 = vpop.permute.xlu0 %919
        %921 = vrot.lane.b32.xlu0 %v513, 16
        %v922 = vpop.permute.xlu0 %921
        %923 = vrot.lane.b32.xlu0 %v508, 16
        %v924 = vpop.permute.xlu0 %923
        %925 = vrot.lane.b32.xlu0 %v510, 16
        %v926 = vpop.permute.xlu0 %925
        %927 = vrot.lane.b32.xlu0 %v512, 16
        %v928 = vpop.permute.xlu0 %927
        %929 = vrot.lane.b32.xlu0 %v514, 16
        %v930 = vpop.permute.xlu0 %929
        %vm931 = vcmp.lt.s32.totalorder %v537, 16
        %v932 = vsel %vm931, %v916, %v924
        %v933 = vsel %vm931, %v918, %v926
        %v934 = vsel %vm931, %v920, %v928
        %v935 = vsel %vm931, %v922, %v930
        %v936 = vsel %vm931, %v924, %v916
        %v937 = vsel %vm931, %v926, %v918
        %v938 = vsel %vm931, %v928, %v920
        %v939 = vsel %vm931, %v930, %v922
        %940 = vrot.lane.b32.xlu0 %v936, 2
        %v941 = vpop.permute.xlu0 %940
        %942 = vrot.lane.b32.xlu0 %v937, 2
        %v943 = vpop.permute.xlu0 %942
        %944 = vrot.lane.b32.xlu0 %v938, 2
        %v945 = vpop.permute.xlu0 %944
        %946 = vrot.lane.b32.xlu0 %v939, 2
        %v947 = vpop.permute.xlu0 %946
        %948 = vrot.lane.b32.xlu0 %v932, 2
        %v949 = vpop.permute.xlu0 %948
        %950 = vrot.lane.b32.xlu0 %v933, 2
        %v951 = vpop.permute.xlu0 %950
        %952 = vrot.lane.b32.xlu0 %v934, 2
        %v953 = vpop.permute.xlu0 %952
        %954 = vrot.lane.b32.xlu0 %v935, 2
        %v955 = vpop.permute.xlu0 %954
        %v956 = vsel %vm563, %v941, %v949
        %v957 = vsel %vm563, %v943, %v951
        %v958 = vsel %vm563, %v945, %v953
        %v959 = vsel %vm563, %v947, %v955
        %v960 = vsel %vm563, %v949, %v941
        %v961 = vsel %vm563, %v951, %v943
        %v962 = vsel %vm563, %v953, %v945
        %v963 = vsel %vm563, %v955, %v947
        %s964 = scalar_lea.vmem [#allocation11], 10
        %v965 = vld [vmem:[%s964] sm:$0x3]
        %v967 = vlaneseq
        %v968 = vshrl.u32 %v967, 7
        %v969 = vsub.s32 0, %v968
        %v970 = vrot.slane %v965, %v969
        %v971 = vlaneseq
        %v972 = vshrl.u32 %v971, 7
        %v973 = vsub.s32 1, %v972
        %v974 = vrot.slane %v965, %v973
        %v977 = vmul.f32 %v960, %v970
        %v978 = vmul.f32 %v956, %v974
        %v979 = vmul.f32 %v961, %v970
        %v980 = vmul.f32 %v957, %v974
        %v981 = vmul.f32 %v962, %v970
        %v982 = vmul.f32 %v958, %v974
        %v983 = vmul.f32 %v963, %v970
        %v984 = vmul.f32 %v959, %v974
        %985 = vset.pattern.permute.xlu0 5
        %986 = vperm.xlu0 %985, %v516
        %v987 = vpop.permute.xlu0 %986
        %989 = vset.pattern.permute.xlu0 5
        %990 = vperm.xlu0 %989, %v517
        %v991 = vpop.permute.xlu0 %990
        %993 = vset.pattern.permute.xlu0 5
        %994 = vperm.xlu0 %993, %v518
        %v995 = vpop.permute.xlu0 %994
        %997 = vset.pattern.permute.xlu0 5
        %998 = vperm.xlu0 %997, %v519
        %v999 = vpop.permute.xlu0 %998
        %v1001 = vmul.f32 %v977, %v987
        %v1002 = vmul.f32 %v978, %v987
        %v1003 = vmul.f32 %v979, %v991
        %v1004 = vmul.f32 %v980, %v991
        %v1005 = vmul.f32 %v981, %v995
        %v1006 = vmul.f32 %v982, %v995
        %v1007 = vmul.f32 %v983, %v999
        %v1008 = vmul.f32 %v984, %v999
        %v1009 = vadd.f32 %v907, %v1001
        %v1010 = vadd.f32 %v908, %v1002
        %v1011 = vadd.f32 %v909, %v1003
        %v1012 = vadd.f32 %v910, %v1004
        %v1013 = vadd.f32 %v911, %v1005
        %v1014 = vadd.f32 %v912, %v1006
        %v1015 = vadd.f32 %v913, %v1007
        %v1016 = vadd.f32 %v914, %v1008
        %1017 = vrot.lane.b32.xlu0 %v936, 1
        %v1018 = vpop.permute.xlu0 %1017
        %1019 = vrot.lane.b32.xlu0 %v937, 1
        %v1020 = vpop.permute.xlu0 %1019
        %1021 = vrot.lane.b32.xlu0 %v938, 1
        %v1022 = vpop.permute.xlu0 %1021
        %1023 = vrot.lane.b32.xlu0 %v939, 1
        %v1024 = vpop.permute.xlu0 %1023
        %1025 = vrot.lane.b32.xlu0 %v932, 1
        %v1026 = vpop.permute.xlu0 %1025
        %1027 = vrot.lane.b32.xlu0 %v933, 1
        %v1028 = vpop.permute.xlu0 %1027
        %1029 = vrot.lane.b32.xlu0 %v934, 1
        %v1030 = vpop.permute.xlu0 %1029
        %1031 = vrot.lane.b32.xlu0 %v935, 1
        %v1032 = vpop.permute.xlu0 %1031
        %v1033 = vsel %vm644, %v1018, %v1026
        %v1034 = vsel %vm644, %v1020, %v1028
        %v1035 = vsel %vm644, %v1022, %v1030
        %v1036 = vsel %vm644, %v1024, %v1032
        %v1037 = vsel %vm644, %v1026, %v1018
        %v1038 = vsel %vm644, %v1028, %v1020
        %v1039 = vsel %vm644, %v1030, %v1022
        %v1040 = vsel %vm644, %v1032, %v1024
        %s1041 = scalar_lea.vmem [#allocation11], 12
        %v1042 = vld [vmem:[%s1041] sm:$0x3]
        %v1044 = vlaneseq
        %v1045 = vshrl.u32 %v1044, 7
        %v1046 = vsub.s32 0, %v1045
        %v1047 = vrot.slane %v1042, %v1046
        %v1048 = vlaneseq
        %v1049 = vshrl.u32 %v1048, 7
        %v1050 = vsub.s32 1, %v1049
        %v1051 = vrot.slane %v1042, %v1050
        %v1054 = vmul.f32 %v1037, %v1047
        %v1055 = vmul.f32 %v1033, %v1051
        %v1056 = vmul.f32 %v1038, %v1047
        %v1057 = vmul.f32 %v1034, %v1051
        %v1058 = vmul.f32 %v1039, %v1047
        %v1059 = vmul.f32 %v1035, %v1051
        %v1060 = vmul.f32 %v1040, %v1047
        %v1061 = vmul.f32 %v1036, %v1051
        %1062 = vset.pattern.permute.xlu0 6
        %1063 = vperm.xlu0 %1062, %v516
        %v1064 = vpop.permute.xlu0 %1063
        %1066 = vset.pattern.permute.xlu0 6
        %1067 = vperm.xlu0 %1066, %v517
        %v1068 = vpop.permute.xlu0 %1067
        %1070 = vset.pattern.permute.xlu0 6
        %1071 = vperm.xlu0 %1070, %v518
        %v1072 = vpop.permute.xlu0 %1071
        %1074 = vset.pattern.permute.xlu0 6
        %1075 = vperm.xlu0 %1074, %v519
        %v1076 = vpop.permute.xlu0 %1075
        %v1078 = vmul.f32 %v1054, %v1064
        %v1079 = vmul.f32 %v1055, %v1064
        %v1080 = vmul.f32 %v1056, %v1068
        %v1081 = vmul.f32 %v1057, %v1068
        %v1082 = vmul.f32 %v1058, %v1072
        %v1083 = vmul.f32 %v1059, %v1072
        %v1084 = vmul.f32 %v1060, %v1076
        %v1085 = vmul.f32 %v1061, %v1076
        %v1086 = vadd.f32 %v1009, %v1078
        %v1087 = vadd.f32 %v1010, %v1079
        %v1088 = vadd.f32 %v1011, %v1080
        %v1089 = vadd.f32 %v1012, %v1081
        %v1090 = vadd.f32 %v1013, %v1082
        %v1091 = vadd.f32 %v1014, %v1083
        %v1092 = vadd.f32 %v1015, %v1084
        %v1093 = vadd.f32 %v1016, %v1085
        %s1094 = scalar_lea.vmem [#allocation11], 14
        %v1095 = vld [vmem:[%s1094] sm:$0x3]
        %v1097 = vlaneseq
        %v1098 = vshrl.u32 %v1097, 7
        %v1099 = vsub.s32 0, %v1098
        %v1100 = vrot.slane %v1095, %v1099
        %v1101 = vlaneseq
        %v1102 = vshrl.u32 %v1101, 7
        %v1103 = vsub.s32 1, %v1102
        %v1104 = vrot.slane %v1095, %v1103
        %v1107 = vmul.f32 %v936, %v1100
        %v1108 = vmul.f32 %v932, %v1104
        %v1109 = vmul.f32 %v937, %v1100
        %v1110 = vmul.f32 %v933, %v1104
        %v1111 = vmul.f32 %v938, %v1100
        %v1112 = vmul.f32 %v934, %v1104
        %v1113 = vmul.f32 %v939, %v1100
        %v1114 = vmul.f32 %v935, %v1104
        %1115 = vset.pattern.permute.xlu0 7
        %1116 = vperm.xlu0 %1115, %v516
        %v1117 = vpop.permute.xlu0 %1116
        %1119 = vset.pattern.permute.xlu0 7
        %1120 = vperm.xlu0 %1119, %v517
        %v1121 = vpop.permute.xlu0 %1120
        %1123 = vset.pattern.permute.xlu0 7
        %1124 = vperm.xlu0 %1123, %v518
        %v1125 = vpop.permute.xlu0 %1124
        %1127 = vset.pattern.permute.xlu0 7
        %1128 = vperm.xlu0 %1127, %v519
        %v1129 = vpop.permute.xlu0 %1128
        %v1131 = vmul.f32 %v1107, %v1117
        %v1132 = vmul.f32 %v1108, %v1117
        %v1133 = vmul.f32 %v1109, %v1121
        %v1134 = vmul.f32 %v1110, %v1121
        %v1135 = vmul.f32 %v1111, %v1125
        %v1136 = vmul.f32 %v1112, %v1125
        %v1137 = vmul.f32 %v1113, %v1129
        %v1138 = vmul.f32 %v1114, %v1129
        %v1139 = vadd.f32 %v1086, %v1131
        %v1140 = vadd.f32 %v1087, %v1132
        %v1141 = vadd.f32 %v1088, %v1133
        %v1142 = vadd.f32 %v1089, %v1134
        %v1143 = vadd.f32 %v1090, %v1135
        %v1144 = vadd.f32 %v1091, %v1136
        %v1145 = vadd.f32 %v1092, %v1137
        %v1146 = vadd.f32 %v1093, %v1138
        %1147 = vrot.lane.b32.xlu0 %v936, 127
        %v1148 = vpop.permute.xlu0 %1147
        %1149 = vrot.lane.b32.xlu0 %v937, 127
        %v1150 = vpop.permute.xlu0 %1149
        %1151 = vrot.lane.b32.xlu0 %v938, 127
        %v1152 = vpop.permute.xlu0 %1151
        %1153 = vrot.lane.b32.xlu0 %v939, 127
        %v1154 = vpop.permute.xlu0 %1153
        %1155 = vrot.lane.b32.xlu0 %v932, 127
        %v1156 = vpop.permute.xlu0 %1155
        %1157 = vrot.lane.b32.xlu0 %v933, 127
        %v1158 = vpop.permute.xlu0 %1157
        %1159 = vrot.lane.b32.xlu0 %v934, 127
        %v1160 = vpop.permute.xlu0 %1159
        %1161 = vrot.lane.b32.xlu0 %v935, 127
        %v1162 = vpop.permute.xlu0 %1161
        %v1163 = vsel %vm775, %v1148, %v1156
        %v1164 = vsel %vm775, %v1150, %v1158
        %v1165 = vsel %vm775, %v1152, %v1160
        %v1166 = vsel %vm775, %v1154, %v1162
        %v1167 = vsel %vm775, %v1156, %v1148
        %v1168 = vsel %vm775, %v1158, %v1150
        %v1169 = vsel %vm775, %v1160, %v1152
        %v1170 = vsel %vm775, %v1162, %v1154
        %s1171 = scalar_lea.vmem [#allocation11], 16
        %v1172 = vld [vmem:[%s1171] sm:$0x3]
        %v1174 = vlaneseq
        %v1175 = vshrl.u32 %v1174, 7
        %v1176 = vsub.s32 0, %v1175
        %v1177 = vrot.slane %v1172, %v1176
        %v1178 = vlaneseq
        %v1179 = vshrl.u32 %v1178, 7
        %v1180 = vsub.s32 1, %v1179
        %v1181 = vrot.slane %v1172, %v1180
        %v1184 = vmul.f32 %v1163, %v1177
        %v1185 = vmul.f32 %v1167, %v1181
        %v1186 = vmul.f32 %v1164, %v1177
        %v1187 = vmul.f32 %v1168, %v1181
        %v1188 = vmul.f32 %v1165, %v1177
        %v1189 = vmul.f32 %v1169, %v1181
        %v1190 = vmul.f32 %v1166, %v1177
        %v1191 = vmul.f32 %v1170, %v1181
        %1192 = vset.pattern.permute.xlu0 8
        %1193 = vperm.xlu0 %1192, %v516
        %v1194 = vpop.permute.xlu0 %1193
        %1196 = vset.pattern.permute.xlu0 8
        %1197 = vperm.xlu0 %1196, %v517
        %v1198 = vpop.permute.xlu0 %1197
        %1200 = vset.pattern.permute.xlu0 8
        %1201 = vperm.xlu0 %1200, %v518
        %v1202 = vpop.permute.xlu0 %1201
        %1204 = vset.pattern.permute.xlu0 8
        %1205 = vperm.xlu0 %1204, %v519
        %v1206 = vpop.permute.xlu0 %1205
        %v1208 = vmul.f32 %v1184, %v1194
        %v1209 = vmul.f32 %v1185, %v1194
        %v1210 = vmul.f32 %v1186, %v1198
        %v1211 = vmul.f32 %v1187, %v1198
        %v1212 = vmul.f32 %v1188, %v1202
        %v1213 = vmul.f32 %v1189, %v1202
        %v1214 = vmul.f32 %v1190, %v1206
        %v1215 = vmul.f32 %v1191, %v1206
        %v1216 = vadd.f32 %v1139, %v1208
        %v1217 = vadd.f32 %v1140, %v1209
        %v1218 = vadd.f32 %v1141, %v1210
        %v1219 = vadd.f32 %v1142, %v1211
        %v1220 = vadd.f32 %v1143, %v1212
        %v1221 = vadd.f32 %v1144, %v1213
        %v1222 = vadd.f32 %v1145, %v1214
        %v1223 = vadd.f32 %v1146, %v1215
        %1224 = vrot.lane.b32.xlu0 %v936, 126
        %v1225 = vpop.permute.xlu0 %1224
        %1226 = vrot.lane.b32.xlu0 %v937, 126
        %v1227 = vpop.permute.xlu0 %1226
        %1228 = vrot.lane.b32.xlu0 %v938, 126
        %v1229 = vpop.permute.xlu0 %1228
        %1230 = vrot.lane.b32.xlu0 %v939, 126
        %v1231 = vpop.permute.xlu0 %1230
        %1232 = vrot.lane.b32.xlu0 %v932, 126
        %v1233 = vpop.permute.xlu0 %1232
        %1234 = vrot.lane.b32.xlu0 %v933, 126
        %v1235 = vpop.permute.xlu0 %1234
        %1236 = vrot.lane.b32.xlu0 %v934, 126
        %v1237 = vpop.permute.xlu0 %1236
        %1238 = vrot.lane.b32.xlu0 %v935, 126
        %v1239 = vpop.permute.xlu0 %1238
        %v1240 = vsel %vm853, %v1225, %v1233
        %v1241 = vsel %vm853, %v1227, %v1235
        %v1242 = vsel %vm853, %v1229, %v1237
        %v1243 = vsel %vm853, %v1231, %v1239
        %v1244 = vsel %vm853, %v1233, %v1225
        %v1245 = vsel %vm853, %v1235, %v1227
        %v1246 = vsel %vm853, %v1237, %v1229
        %v1247 = vsel %vm853, %v1239, %v1231
        %s1248 = scalar_lea.vmem [#allocation11], 18
        %v1249 = vld [vmem:[%s1248] sm:$0x3]
        %v1251 = vlaneseq
        %v1252 = vshrl.u32 %v1251, 7
        %v1253 = vsub.s32 0, %v1252
        %v1254 = vrot.slane %v1249, %v1253
        %v1255 = vlaneseq
        %v1256 = vshrl.u32 %v1255, 7
        %v1257 = vsub.s32 1, %v1256
        %v1258 = vrot.slane %v1249, %v1257
        %v1261 = vmul.f32 %v1240, %v1254
        %v1262 = vmul.f32 %v1244, %v1258
        %v1263 = vmul.f32 %v1241, %v1254
        %v1264 = vmul.f32 %v1245, %v1258
        %v1265 = vmul.f32 %v1242, %v1254
        %v1266 = vmul.f32 %v1246, %v1258
        %v1267 = vmul.f32 %v1243, %v1254
        %v1268 = vmul.f32 %v1247, %v1258
        %1269 = vset.pattern.permute.xlu0 9
        %1270 = vperm.xlu0 %1269, %v516
        %v1271 = vpop.permute.xlu0 %1270
        %1273 = vset.pattern.permute.xlu0 9
        %1274 = vperm.xlu0 %1273, %v517
        %v1275 = vpop.permute.xlu0 %1274
        %1277 = vset.pattern.permute.xlu0 9
        %1278 = vperm.xlu0 %1277, %v518
        %v1279 = vpop.permute.xlu0 %1278
        %1281 = vset.pattern.permute.xlu0 9
        %1282 = vperm.xlu0 %1281, %v519
        %v1283 = vpop.permute.xlu0 %1282
        %v1285 = vmul.f32 %v1261, %v1271
        %v1286 = vmul.f32 %v1262, %v1271
        %v1287 = vmul.f32 %v1263, %v1275
        %v1288 = vmul.f32 %v1264, %v1275
        %v1289 = vmul.f32 %v1265, %v1279
        %v1290 = vmul.f32 %v1266, %v1279
        %v1291 = vmul.f32 %v1267, %v1283
        %v1292 = vmul.f32 %v1268, %v1283
        %v1293 = vadd.f32 %v1216, %v1285
        %v1294 = vadd.f32 %v1217, %v1286
        %v1295 = vadd.f32 %v1218, %v1287
        %v1296 = vadd.f32 %v1219, %v1288
        %v1297 = vadd.f32 %v1220, %v1289
        %v1298 = vadd.f32 %v1221, %v1290
        %v1299 = vadd.f32 %v1222, %v1291
        %v1300 = vadd.f32 %v1223, %v1292
        %1301 = vrot.lane.b32.xlu0 %v507, 2
        %v1302 = vpop.permute.xlu0 %1301
        %1303 = vrot.lane.b32.xlu0 %v509, 2
        %v1304 = vpop.permute.xlu0 %1303
        %1305 = vrot.lane.b32.xlu0 %v511, 2
        %v1306 = vpop.permute.xlu0 %1305
        %1307 = vrot.lane.b32.xlu0 %v513, 2
        %v1308 = vpop.permute.xlu0 %1307
        %1309 = vrot.lane.b32.xlu0 %v508, 2
        %v1310 = vpop.permute.xlu0 %1309
        %1311 = vrot.lane.b32.xlu0 %v510, 2
        %v1312 = vpop.permute.xlu0 %1311
        %1313 = vrot.lane.b32.xlu0 %v512, 2
        %v1314 = vpop.permute.xlu0 %1313
        %1315 = vrot.lane.b32.xlu0 %v514, 2
        %v1316 = vpop.permute.xlu0 %1315
        %v1317 = vsel %vm563, %v1302, %v1310
        %v1318 = vsel %vm563, %v1304, %v1312
        %v1319 = vsel %vm563, %v1306, %v1314
        %v1320 = vsel %vm563, %v1308, %v1316
        %v1321 = vsel %vm563, %v1310, %v1302
        %v1322 = vsel %vm563, %v1312, %v1304
        %v1323 = vsel %vm563, %v1314, %v1306
        %v1324 = vsel %vm563, %v1316, %v1308
        %s1325 = scalar_lea.vmem [#allocation11], 20
        %v1326 = vld [vmem:[%s1325] sm:$0x3]
        %v1328 = vlaneseq
        %v1329 = vshrl.u32 %v1328, 7
        %v1330 = vsub.s32 0, %v1329
        %v1331 = vrot.slane %v1326, %v1330
        %v1332 = vlaneseq
        %v1333 = vshrl.u32 %v1332, 7
        %v1334 = vsub.s32 1, %v1333
        %v1335 = vrot.slane %v1326, %v1334
        %v1338 = vmul.f32 %v1321, %v1331
        %v1339 = vmul.f32 %v1317, %v1335
        %v1340 = vmul.f32 %v1322, %v1331
        %v1341 = vmul.f32 %v1318, %v1335
        %v1342 = vmul.f32 %v1323, %v1331
        %v1343 = vmul.f32 %v1319, %v1335
        %v1344 = vmul.f32 %v1324, %v1331
        %v1345 = vmul.f32 %v1320, %v1335
        %1346 = vset.pattern.permute.xlu0 10
        %1347 = vperm.xlu0 %1346, %v516
        %v1348 = vpop.permute.xlu0 %1347
        %1350 = vset.pattern.permute.xlu0 10
        %1351 = vperm.xlu0 %1350, %v517
        %v1352 = vpop.permute.xlu0 %1351
        %1354 = vset.pattern.permute.xlu0 10
        %1355 = vperm.xlu0 %1354, %v518
        %v1356 = vpop.permute.xlu0 %1355
        %1358 = vset.pattern.permute.xlu0 10
        %1359 = vperm.xlu0 %1358, %v519
        %v1360 = vpop.permute.xlu0 %1359
        %v1362 = vmul.f32 %v1338, %v1348
        %v1363 = vmul.f32 %v1339, %v1348
        %v1364 = vmul.f32 %v1340, %v1352
        %v1365 = vmul.f32 %v1341, %v1352
        %v1366 = vmul.f32 %v1342, %v1356
        %v1367 = vmul.f32 %v1343, %v1356
        %v1368 = vmul.f32 %v1344, %v1360
        %v1369 = vmul.f32 %v1345, %v1360
        %v1370 = vadd.f32 %v1293, %v1362
        %v1371 = vadd.f32 %v1294, %v1363
        %v1372 = vadd.f32 %v1295, %v1364
        %v1373 = vadd.f32 %v1296, %v1365
        %v1374 = vadd.f32 %v1297, %v1366
        %v1375 = vadd.f32 %v1298, %v1367
        %v1376 = vadd.f32 %v1299, %v1368
        %v1377 = vadd.f32 %v1300, %v1369
        %1378 = vrot.lane.b32.xlu0 %v507, 1
        %v1379 = vpop.permute.xlu0 %1378
        %1380 = vrot.lane.b32.xlu0 %v509, 1
        %v1381 = vpop.permute.xlu0 %1380
        %1382 = vrot.lane.b32.xlu0 %v511, 1
        %v1383 = vpop.permute.xlu0 %1382
        %1384 = vrot.lane.b32.xlu0 %v513, 1
        %v1385 = vpop.permute.xlu0 %1384
        %1386 = vrot.lane.b32.xlu0 %v508, 1
        %v1387 = vpop.permute.xlu0 %1386
        %1388 = vrot.lane.b32.xlu0 %v510, 1
        %v1389 = vpop.permute.xlu0 %1388
        %1390 = vrot.lane.b32.xlu0 %v512, 1
        %v1391 = vpop.permute.xlu0 %1390
        %1392 = vrot.lane.b32.xlu0 %v514, 1
        %v1393 = vpop.permute.xlu0 %1392
        %v1394 = vsel %vm644, %v1379, %v1387
        %v1395 = vsel %vm644, %v1381, %v1389
        %v1396 = vsel %vm644, %v1383, %v1391
        %v1397 = vsel %vm644, %v1385, %v1393
        %v1398 = vsel %vm644, %v1387, %v1379
        %v1399 = vsel %vm644, %v1389, %v1381
        %v1400 = vsel %vm644, %v1391, %v1383
        %v1401 = vsel %vm644, %v1393, %v1385
        %s1402 = scalar_lea.vmem [#allocation11], 22
        %v1403 = vld [vmem:[%s1402] sm:$0x3]
        %v1405 = vlaneseq
        %v1406 = vshrl.u32 %v1405, 7
        %v1407 = vsub.s32 0, %v1406
        %v1408 = vrot.slane %v1403, %v1407
        %v1409 = vlaneseq
        %v1410 = vshrl.u32 %v1409, 7
        %v1411 = vsub.s32 1, %v1410
        %v1412 = vrot.slane %v1403, %v1411
        %v1415 = vmul.f32 %v1398, %v1408
        %v1416 = vmul.f32 %v1394, %v1412
        %v1417 = vmul.f32 %v1399, %v1408
        %v1418 = vmul.f32 %v1395, %v1412
        %v1419 = vmul.f32 %v1400, %v1408
        %v1420 = vmul.f32 %v1396, %v1412
        %v1421 = vmul.f32 %v1401, %v1408
        %v1422 = vmul.f32 %v1397, %v1412
        %1423 = vset.pattern.permute.xlu0 11
        %1424 = vperm.xlu0 %1423, %v516
        %v1425 = vpop.permute.xlu0 %1424
        %1427 = vset.pattern.permute.xlu0 11
        %1428 = vperm.xlu0 %1427, %v517
        %v1429 = vpop.permute.xlu0 %1428
        %1431 = vset.pattern.permute.xlu0 11
        %1432 = vperm.xlu0 %1431, %v518
        %v1433 = vpop.permute.xlu0 %1432
        %1435 = vset.pattern.permute.xlu0 11
        %1436 = vperm.xlu0 %1435, %v519
        %v1437 = vpop.permute.xlu0 %1436
        %v1439 = vmul.f32 %v1415, %v1425
        %v1440 = vmul.f32 %v1416, %v1425
        %v1441 = vmul.f32 %v1417, %v1429
        %v1442 = vmul.f32 %v1418, %v1429
        %v1443 = vmul.f32 %v1419, %v1433
        %v1444 = vmul.f32 %v1420, %v1433
        %v1445 = vmul.f32 %v1421, %v1437
        %v1446 = vmul.f32 %v1422, %v1437
        %v1447 = vadd.f32 %v1370, %v1439
        %v1448 = vadd.f32 %v1371, %v1440
        %v1449 = vadd.f32 %v1372, %v1441
        %v1450 = vadd.f32 %v1373, %v1442
        %v1451 = vadd.f32 %v1374, %v1443
        %v1452 = vadd.f32 %v1375, %v1444
        %v1453 = vadd.f32 %v1376, %v1445
        %v1454 = vadd.f32 %v1377, %v1446
        %s1455 = scalar_lea.vmem [#allocation11], 24
        %v1456 = vld [vmem:[%s1455] sm:$0x3]
        %v1458 = vlaneseq
        %v1459 = vshrl.u32 %v1458, 7
        %v1460 = vsub.s32 0, %v1459
        %v1461 = vrot.slane %v1456, %v1460
        %v1462 = vlaneseq
        %v1463 = vshrl.u32 %v1462, 7
        %v1464 = vsub.s32 1, %v1463
        %v1465 = vrot.slane %v1456, %v1464
        %v1468 = vmul.f32 %v507, %v1461
        %v1469 = vmul.f32 %v508, %v1465
        %v1470 = vmul.f32 %v509, %v1461
        %v1471 = vmul.f32 %v510, %v1465
        %v1472 = vmul.f32 %v511, %v1461
        %v1473 = vmul.f32 %v512, %v1465
        %v1474 = vmul.f32 %v513, %v1461
        %v1475 = vmul.f32 %v514, %v1465
        %1476 = vset.pattern.permute.xlu0 12
        %1477 = vperm.xlu0 %1476, %v516
        %v1478 = vpop.permute.xlu0 %1477
        %1480 = vset.pattern.permute.xlu0 12
        %1481 = vperm.xlu0 %1480, %v517
        %v1482 = vpop.permute.xlu0 %1481
        %1484 = vset.pattern.permute.xlu0 12
        %1485 = vperm.xlu0 %1484, %v518
        %v1486 = vpop.permute.xlu0 %1485
        %1488 = vset.pattern.permute.xlu0 12
        %1489 = vperm.xlu0 %1488, %v519
        %v1490 = vpop.permute.xlu0 %1489
        %v1492 = vmul.f32 %v1468, %v1478
        %v1493 = vmul.f32 %v1469, %v1478
        %v1494 = vmul.f32 %v1470, %v1482
        %v1495 = vmul.f32 %v1471, %v1482
        %v1496 = vmul.f32 %v1472, %v1486
        %v1497 = vmul.f32 %v1473, %v1486
        %v1498 = vmul.f32 %v1474, %v1490
        %v1499 = vmul.f32 %v1475, %v1490
        %v1500 = vadd.f32 %v1447, %v1492
        %v1501 = vadd.f32 %v1448, %v1493
        %v1502 = vadd.f32 %v1449, %v1494
        %v1503 = vadd.f32 %v1450, %v1495
        %v1504 = vadd.f32 %v1451, %v1496
        %v1505 = vadd.f32 %v1452, %v1497
        %v1506 = vadd.f32 %v1453, %v1498
        %v1507 = vadd.f32 %v1454, %v1499
        %1508 = vrot.lane.b32.xlu0 %v507, 127
        %v1509 = vpop.permute.xlu0 %1508
        %1510 = vrot.lane.b32.xlu0 %v509, 127
        %v1511 = vpop.permute.xlu0 %1510
        %1512 = vrot.lane.b32.xlu0 %v511, 127
        %v1513 = vpop.permute.xlu0 %1512
        %1514 = vrot.lane.b32.xlu0 %v513, 127
        %v1515 = vpop.permute.xlu0 %1514
        %1516 = vrot.lane.b32.xlu0 %v508, 127
        %v1517 = vpop.permute.xlu0 %1516
        %1518 = vrot.lane.b32.xlu0 %v510, 127
        %v1519 = vpop.permute.xlu0 %1518
        %1520 = vrot.lane.b32.xlu0 %v512, 127
        %v1521 = vpop.permute.xlu0 %1520
        %1522 = vrot.lane.b32.xlu0 %v514, 127
        %v1523 = vpop.permute.xlu0 %1522
        %v1524 = vsel %vm775, %v1509, %v1517
        %v1525 = vsel %vm775, %v1511, %v1519
        %v1526 = vsel %vm775, %v1513, %v1521
        %v1527 = vsel %vm775, %v1515, %v1523
        %v1528 = vsel %vm775, %v1517, %v1509
        %v1529 = vsel %vm775, %v1519, %v1511
        %v1530 = vsel %vm775, %v1521, %v1513
        %v1531 = vsel %vm775, %v1523, %v1515
        %s1532 = scalar_lea.vmem [#allocation11], 26
        %v1533 = vld [vmem:[%s1532] sm:$0x3]
        %v1535 = vlaneseq
        %v1536 = vshrl.u32 %v1535, 7
        %v1537 = vsub.s32 0, %v1536
        %v1538 = vrot.slane %v1533, %v1537
        %v1539 = vlaneseq
        %v1540 = vshrl.u32 %v1539, 7
        %v1541 = vsub.s32 1, %v1540
        %v1542 = vrot.slane %v1533, %v1541
        %v1545 = vmul.f32 %v1524, %v1538
        %v1546 = vmul.f32 %v1528, %v1542
        %v1547 = vmul.f32 %v1525, %v1538
        %v1548 = vmul.f32 %v1529, %v1542
        %v1549 = vmul.f32 %v1526, %v1538
        %v1550 = vmul.f32 %v1530, %v1542
        %v1551 = vmul.f32 %v1527, %v1538
        %v1552 = vmul.f32 %v1531, %v1542
        %1553 = vset.pattern.permute.xlu0 13
        %1554 = vperm.xlu0 %1553, %v516
        %v1555 = vpop.permute.xlu0 %1554
        %1557 = vset.pattern.permute.xlu0 13
        %1558 = vperm.xlu0 %1557, %v517
        %v1559 = vpop.permute.xlu0 %1558
        %1561 = vset.pattern.permute.xlu0 13
        %1562 = vperm.xlu0 %1561, %v518
        %v1563 = vpop.permute.xlu0 %1562
        %1565 = vset.pattern.permute.xlu0 13
        %1566 = vperm.xlu0 %1565, %v519
        %v1567 = vpop.permute.xlu0 %1566
        %v1569 = vmul.f32 %v1545, %v1555
        %v1570 = vmul.f32 %v1546, %v1555
        %v1571 = vmul.f32 %v1547, %v1559
        %v1572 = vmul.f32 %v1548, %v1559
        %v1573 = vmul.f32 %v1549, %v1563
        %v1574 = vmul.f32 %v1550, %v1563
        %v1575 = vmul.f32 %v1551, %v1567
        %v1576 = vmul.f32 %v1552, %v1567
        %v1577 = vadd.f32 %v1500, %v1569
        %v1578 = vadd.f32 %v1501, %v1570
        %v1579 = vadd.f32 %v1502, %v1571
        %v1580 = vadd.f32 %v1503, %v1572
        %v1581 = vadd.f32 %v1504, %v1573
        %v1582 = vadd.f32 %v1505, %v1574
        %v1583 = vadd.f32 %v1506, %v1575
        %v1584 = vadd.f32 %v1507, %v1576
        %1585 = vrot.lane.b32.xlu0 %v507, 126
        %v1586 = vpop.permute.xlu0 %1585
        %1587 = vrot.lane.b32.xlu0 %v509, 126
        %v1588 = vpop.permute.xlu0 %1587
        %1589 = vrot.lane.b32.xlu0 %v511, 126
        %v1590 = vpop.permute.xlu0 %1589
        %1591 = vrot.lane.b32.xlu0 %v513, 126
        %v1592 = vpop.permute.xlu0 %1591
        %1593 = vrot.lane.b32.xlu0 %v508, 126
        %v1594 = vpop.permute.xlu0 %1593
        %1595 = vrot.lane.b32.xlu0 %v510, 126
        %v1596 = vpop.permute.xlu0 %1595
        %1597 = vrot.lane.b32.xlu0 %v512, 126
        %v1598 = vpop.permute.xlu0 %1597
        %1599 = vrot.lane.b32.xlu0 %v514, 126
        %v1600 = vpop.permute.xlu0 %1599
        %v1601 = vsel %vm853, %v1586, %v1594
        %v1602 = vsel %vm853, %v1588, %v1596
        %v1603 = vsel %vm853, %v1590, %v1598
        %v1604 = vsel %vm853, %v1592, %v1600
        %v1605 = vsel %vm853, %v1594, %v1586
        %v1606 = vsel %vm853, %v1596, %v1588
        %v1607 = vsel %vm853, %v1598, %v1590
        %v1608 = vsel %vm853, %v1600, %v1592
        %s1609 = scalar_lea.vmem [#allocation11], 28
        %v1610 = vld [vmem:[%s1609] sm:$0x3]
        %v1612 = vlaneseq
        %v1613 = vshrl.u32 %v1612, 7
        %v1614 = vsub.s32 0, %v1613
        %v1615 = vrot.slane %v1610, %v1614
        %v1616 = vlaneseq
        %v1617 = vshrl.u32 %v1616, 7
        %v1618 = vsub.s32 1, %v1617
        %v1619 = vrot.slane %v1610, %v1618
        %v1622 = vmul.f32 %v1601, %v1615
        %v1623 = vmul.f32 %v1605, %v1619
        %v1624 = vmul.f32 %v1602, %v1615
        %v1625 = vmul.f32 %v1606, %v1619
        %v1626 = vmul.f32 %v1603, %v1615
        %v1627 = vmul.f32 %v1607, %v1619
        %v1628 = vmul.f32 %v1604, %v1615
        %v1629 = vmul.f32 %v1608, %v1619
        %1630 = vset.pattern.permute.xlu0 14
        %1631 = vperm.xlu0 %1630, %v516
        %v1632 = vpop.permute.xlu0 %1631
        %1634 = vset.pattern.permute.xlu0 14
        %1635 = vperm.xlu0 %1634, %v517
        %v1636 = vpop.permute.xlu0 %1635
        %1638 = vset.pattern.permute.xlu0 14
        %1639 = vperm.xlu0 %1638, %v518
        %v1640 = vpop.permute.xlu0 %1639
        %1642 = vset.pattern.permute.xlu0 14
        %1643 = vperm.xlu0 %1642, %v519
        %v1644 = vpop.permute.xlu0 %1643
        %v1646 = vmul.f32 %v1622, %v1632
        %v1647 = vmul.f32 %v1623, %v1632
        %v1648 = vmul.f32 %v1624, %v1636
        %v1649 = vmul.f32 %v1625, %v1636
        %v1650 = vmul.f32 %v1626, %v1640
        %v1651 = vmul.f32 %v1627, %v1640
        %v1652 = vmul.f32 %v1628, %v1644
        %v1653 = vmul.f32 %v1629, %v1644
        %v1654 = vadd.f32 %v1577, %v1646
        %v1655 = vadd.f32 %v1578, %v1647
        %v1656 = vadd.f32 %v1579, %v1648
        %v1657 = vadd.f32 %v1580, %v1649
        %v1658 = vadd.f32 %v1581, %v1650
        %v1659 = vadd.f32 %v1582, %v1651
        %v1660 = vadd.f32 %v1583, %v1652
        %v1661 = vadd.f32 %v1584, %v1653
        %1662 = vrot.lane.b32.xlu0 %v507, 112
        %v1663 = vpop.permute.xlu0 %1662
        %1664 = vrot.lane.b32.xlu0 %v509, 112
        %v1665 = vpop.permute.xlu0 %1664
        %1666 = vrot.lane.b32.xlu0 %v511, 112
        %v1667 = vpop.permute.xlu0 %1666
        %1668 = vrot.lane.b32.xlu0 %v513, 112
        %v1669 = vpop.permute.xlu0 %1668
        %1670 = vrot.lane.b32.xlu0 %v508, 112
        %v1671 = vpop.permute.xlu0 %1670
        %1672 = vrot.lane.b32.xlu0 %v510, 112
        %v1673 = vpop.permute.xlu0 %1672
        %1674 = vrot.lane.b32.xlu0 %v512, 112
        %v1675 = vpop.permute.xlu0 %1674
        %1676 = vrot.lane.b32.xlu0 %v514, 112
        %v1677 = vpop.permute.xlu0 %1676
        %vm1678 = vcmp.lt.s32.totalorder %v537, 112
        %v1679 = vsel %vm1678, %v1663, %v1671
        %v1680 = vsel %vm1678, %v1665, %v1673
        %v1681 = vsel %vm1678, %v1667, %v1675
        %v1682 = vsel %vm1678, %v1669, %v1677
        %v1683 = vsel %vm1678, %v1671, %v1663
        %v1684 = vsel %vm1678, %v1673, %v1665
        %v1685 = vsel %vm1678, %v1675, %v1667
        %v1686 = vsel %vm1678, %v1677, %v1669
        %1687 = vrot.lane.b32.xlu0 %v1679, 2
        %v1688 = vpop.permute.xlu0 %1687
        %1689 = vrot.lane.b32.xlu0 %v1680, 2
        %v1690 = vpop.permute.xlu0 %1689
        %1691 = vrot.lane.b32.xlu0 %v1681, 2
        %v1692 = vpop.permute.xlu0 %1691
        %1693 = vrot.lane.b32.xlu0 %v1682, 2
        %v1694 = vpop.permute.xlu0 %1693
        %1695 = vrot.lane.b32.xlu0 %v1683, 2
        %v1696 = vpop.permute.xlu0 %1695
        %1697 = vrot.lane.b32.xlu0 %v1684, 2
        %v1698 = vpop.permute.xlu0 %1697
        %1699 = vrot.lane.b32.xlu0 %v1685, 2
        %v1700 = vpop.permute.xlu0 %1699
        %1701 = vrot.lane.b32.xlu0 %v1686, 2
        %v1702 = vpop.permute.xlu0 %1701
        %v1703 = vsel %vm563, %v1688, %v1696
        %v1704 = vsel %vm563, %v1690, %v1698
        %v1705 = vsel %vm563, %v1692, %v1700
        %v1706 = vsel %vm563, %v1694, %v1702
        %v1707 = vsel %vm563, %v1696, %v1688
        %v1708 = vsel %vm563, %v1698, %v1690
        %v1709 = vsel %vm563, %v1700, %v1692
        %v1710 = vsel %vm563, %v1702, %v1694
        %s1711 = scalar_lea.vmem [#allocation11], 30
        %v1712 = vld [vmem:[%s1711] sm:$0x3]
        %v1714 = vlaneseq
        %v1715 = vshrl.u32 %v1714, 7
        %v1716 = vsub.s32 0, %v1715
        %v1717 = vrot.slane %v1712, %v1716
        %v1718 = vlaneseq
        %v1719 = vshrl.u32 %v1718, 7
        %v1720 = vsub.s32 1, %v1719
        %v1721 = vrot.slane %v1712, %v1720
        %v1724 = vmul.f32 %v1707, %v1717
        %v1725 = vmul.f32 %v1703, %v1721
        %v1726 = vmul.f32 %v1708, %v1717
        %v1727 = vmul.f32 %v1704, %v1721
        %v1728 = vmul.f32 %v1709, %v1717
        %v1729 = vmul.f32 %v1705, %v1721
        %v1730 = vmul.f32 %v1710, %v1717
        %v1731 = vmul.f32 %v1706, %v1721
        %1732 = vset.pattern.permute.xlu0 15
        %1733 = vperm.xlu0 %1732, %v516
        %v1734 = vpop.permute.xlu0 %1733
        %1736 = vset.pattern.permute.xlu0 15
        %1737 = vperm.xlu0 %1736, %v517
        %v1738 = vpop.permute.xlu0 %1737
        %1740 = vset.pattern.permute.xlu0 15
        %1741 = vperm.xlu0 %1740, %v518
        %v1742 = vpop.permute.xlu0 %1741
        %1744 = vset.pattern.permute.xlu0 15
        %1745 = vperm.xlu0 %1744, %v519
        %v1746 = vpop.permute.xlu0 %1745
        %v1748 = vmul.f32 %v1724, %v1734
        %v1749 = vmul.f32 %v1725, %v1734
        %v1750 = vmul.f32 %v1726, %v1738
        %v1751 = vmul.f32 %v1727, %v1738
        %v1752 = vmul.f32 %v1728, %v1742
        %v1753 = vmul.f32 %v1729, %v1742
        %v1754 = vmul.f32 %v1730, %v1746
        %v1755 = vmul.f32 %v1731, %v1746
        %v1756 = vadd.f32 %v1654, %v1748
        %v1757 = vadd.f32 %v1655, %v1749
        %v1758 = vadd.f32 %v1656, %v1750
        %v1759 = vadd.f32 %v1657, %v1751
        %v1760 = vadd.f32 %v1658, %v1752
        %v1761 = vadd.f32 %v1659, %v1753
        %v1762 = vadd.f32 %v1660, %v1754
        %v1763 = vadd.f32 %v1661, %v1755
        %1764 = vrot.lane.b32.xlu0 %v1679, 1
        %v1765 = vpop.permute.xlu0 %1764
        %1766 = vrot.lane.b32.xlu0 %v1680, 1
        %v1767 = vpop.permute.xlu0 %1766
        %1768 = vrot.lane.b32.xlu0 %v1681, 1
        %v1769 = vpop.permute.xlu0 %1768
        %1770 = vrot.lane.b32.xlu0 %v1682, 1
        %v1771 = vpop.permute.xlu0 %1770
        %1772 = vrot.lane.b32.xlu0 %v1683, 1
        %v1773 = vpop.permute.xlu0 %1772
        %1774 = vrot.lane.b32.xlu0 %v1684, 1
        %v1775 = vpop.permute.xlu0 %1774
        %1776 = vrot.lane.b32.xlu0 %v1685, 1
        %v1777 = vpop.permute.xlu0 %1776
        %1778 = vrot.lane.b32.xlu0 %v1686, 1
        %v1779 = vpop.permute.xlu0 %1778
        %v1780 = vsel %vm644, %v1765, %v1773
        %v1781 = vsel %vm644, %v1767, %v1775
        %v1782 = vsel %vm644, %v1769, %v1777
        %v1783 = vsel %vm644, %v1771, %v1779
        %v1784 = vsel %vm644, %v1773, %v1765
        %v1785 = vsel %vm644, %v1775, %v1767
        %v1786 = vsel %vm644, %v1777, %v1769
        %v1787 = vsel %vm644, %v1779, %v1771
        %s1788 = scalar_lea.vmem [#allocation11], 32
        %v1789 = vld [vmem:[%s1788] sm:$0x3]
        %v1791 = vlaneseq
        %v1792 = vshrl.u32 %v1791, 7
        %v1793 = vsub.s32 0, %v1792
        %v1794 = vrot.slane %v1789, %v1793
        %v1795 = vlaneseq
        %v1796 = vshrl.u32 %v1795, 7
        %v1797 = vsub.s32 1, %v1796
        %v1798 = vrot.slane %v1789, %v1797
        %v1801 = vmul.f32 %v1784, %v1794
        %v1802 = vmul.f32 %v1780, %v1798
        %v1803 = vmul.f32 %v1785, %v1794
        %v1804 = vmul.f32 %v1781, %v1798
        %v1805 = vmul.f32 %v1786, %v1794
        %v1806 = vmul.f32 %v1782, %v1798
        %v1807 = vmul.f32 %v1787, %v1794
        %v1808 = vmul.f32 %v1783, %v1798
        %1809 = vset.pattern.permute.xlu0 16
        %1810 = vperm.xlu0 %1809, %v516
        %v1811 = vpop.permute.xlu0 %1810
        %1813 = vset.pattern.permute.xlu0 16
        %1814 = vperm.xlu0 %1813, %v517
        %v1815 = vpop.permute.xlu0 %1814
        %1817 = vset.pattern.permute.xlu0 16
        %1818 = vperm.xlu0 %1817, %v518
        %v1819 = vpop.permute.xlu0 %1818
        %1821 = vset.pattern.permute.xlu0 16
        %1822 = vperm.xlu0 %1821, %v519
        %v1823 = vpop.permute.xlu0 %1822
        %v1825 = vmul.f32 %v1801, %v1811
        %v1826 = vmul.f32 %v1802, %v1811
        %v1827 = vmul.f32 %v1803, %v1815
        %v1828 = vmul.f32 %v1804, %v1815
        %v1829 = vmul.f32 %v1805, %v1819
        %v1830 = vmul.f32 %v1806, %v1819
        %v1831 = vmul.f32 %v1807, %v1823
        %v1832 = vmul.f32 %v1808, %v1823
        %v1833 = vadd.f32 %v1756, %v1825
        %v1834 = vadd.f32 %v1757, %v1826
        %v1835 = vadd.f32 %v1758, %v1827
        %v1836 = vadd.f32 %v1759, %v1828
        %v1837 = vadd.f32 %v1760, %v1829
        %v1838 = vadd.f32 %v1761, %v1830
        %v1839 = vadd.f32 %v1762, %v1831
        %v1840 = vadd.f32 %v1763, %v1832
        %s1841 = scalar_lea.vmem [#allocation11], 34
        %v1842 = vld [vmem:[%s1841] sm:$0x3]
        %v1844 = vlaneseq
        %v1845 = vshrl.u32 %v1844, 7
        %v1846 = vsub.s32 0, %v1845
        %v1847 = vrot.slane %v1842, %v1846
        %v1848 = vlaneseq
        %v1849 = vshrl.u32 %v1848, 7
        %v1850 = vsub.s32 1, %v1849
        %v1851 = vrot.slane %v1842, %v1850
        %v1854 = vmul.f32 %v1679, %v1847
        %v1855 = vmul.f32 %v1683, %v1851
        %v1856 = vmul.f32 %v1680, %v1847
        %v1857 = vmul.f32 %v1684, %v1851
        %v1858 = vmul.f32 %v1681, %v1847
        %v1859 = vmul.f32 %v1685, %v1851
        %v1860 = vmul.f32 %v1682, %v1847
        %v1861 = vmul.f32 %v1686, %v1851
        %1862 = vset.pattern.permute.xlu0 17
        %1863 = vperm.xlu0 %1862, %v516
        %v1864 = vpop.permute.xlu0 %1863
        %1866 = vset.pattern.permute.xlu0 17
        %1867 = vperm.xlu0 %1866, %v517
        %v1868 = vpop.permute.xlu0 %1867
        %1870 = vset.pattern.permute.xlu0 17
        %1871 = vperm.xlu0 %1870, %v518
        %v1872 = vpop.permute.xlu0 %1871
        %1874 = vset.pattern.permute.xlu0 17
        %1875 = vperm.xlu0 %1874, %v519
        %v1876 = vpop.permute.xlu0 %1875
        %v1878 = vmul.f32 %v1854, %v1864
        %v1879 = vmul.f32 %v1855, %v1864
        %v1880 = vmul.f32 %v1856, %v1868
        %v1881 = vmul.f32 %v1857, %v1868
        %v1882 = vmul.f32 %v1858, %v1872
        %v1883 = vmul.f32 %v1859, %v1872
        %v1884 = vmul.f32 %v1860, %v1876
        %v1885 = vmul.f32 %v1861, %v1876
        %v1886 = vadd.f32 %v1833, %v1878
        %v1887 = vadd.f32 %v1834, %v1879
        %v1888 = vadd.f32 %v1835, %v1880
        %v1889 = vadd.f32 %v1836, %v1881
        %v1890 = vadd.f32 %v1837, %v1882
        %v1891 = vadd.f32 %v1838, %v1883
        %v1892 = vadd.f32 %v1839, %v1884
        %v1893 = vadd.f32 %v1840, %v1885
        %1894 = vrot.lane.b32.xlu0 %v1679, 127
        %v1895 = vpop.permute.xlu0 %1894
        %1896 = vrot.lane.b32.xlu0 %v1680, 127
        %v1897 = vpop.permute.xlu0 %1896
        %1898 = vrot.lane.b32.xlu0 %v1681, 127
        %v1899 = vpop.permute.xlu0 %1898
        %1900 = vrot.lane.b32.xlu0 %v1682, 127
        %v1901 = vpop.permute.xlu0 %1900
        %1902 = vrot.lane.b32.xlu0 %v1683, 127
        %v1903 = vpop.permute.xlu0 %1902
        %1904 = vrot.lane.b32.xlu0 %v1684, 127
        %v1905 = vpop.permute.xlu0 %1904
        %1906 = vrot.lane.b32.xlu0 %v1685, 127
        %v1907 = vpop.permute.xlu0 %1906
        %1908 = vrot.lane.b32.xlu0 %v1686, 127
        %v1909 = vpop.permute.xlu0 %1908
        %v1910 = vsel %vm775, %v1895, %v1903
        %v1911 = vsel %vm775, %v1897, %v1905
        %v1912 = vsel %vm775, %v1899, %v1907
        %v1913 = vsel %vm775, %v1901, %v1909
        %v1914 = vsel %vm775, %v1903, %v1895
        %v1915 = vsel %vm775, %v1905, %v1897
        %v1916 = vsel %vm775, %v1907, %v1899
        %v1917 = vsel %vm775, %v1909, %v1901
        %s1918 = scalar_lea.vmem [#allocation11], 36
        %v1919 = vld [vmem:[%s1918] sm:$0x3]
        %v1921 = vlaneseq
        %v1922 = vshrl.u32 %v1921, 7
        %v1923 = vsub.s32 0, %v1922
        %v1924 = vrot.slane %v1919, %v1923
        %v1925 = vlaneseq
        %v1926 = vshrl.u32 %v1925, 7
        %v1927 = vsub.s32 1, %v1926
        %v1928 = vrot.slane %v1919, %v1927
        %v1931 = vmul.f32 %v1910, %v1924
        %v1932 = vmul.f32 %v1914, %v1928
        %v1933 = vmul.f32 %v1911, %v1924
        %v1934 = vmul.f32 %v1915, %v1928
        %v1935 = vmul.f32 %v1912, %v1924
        %v1936 = vmul.f32 %v1916, %v1928
        %v1937 = vmul.f32 %v1913, %v1924
        %v1938 = vmul.f32 %v1917, %v1928
        %1939 = vset.pattern.permute.xlu0 18
        %1940 = vperm.xlu0 %1939, %v516
        %v1941 = vpop.permute.xlu0 %1940
        %1943 = vset.pattern.permute.xlu0 18
        %1944 = vperm.xlu0 %1943, %v517
        %v1945 = vpop.permute.xlu0 %1944
        %1947 = vset.pattern.permute.xlu0 18
        %1948 = vperm.xlu0 %1947, %v518
        %v1949 = vpop.permute.xlu0 %1948
        %1951 = vset.pattern.permute.xlu0 18
        %1952 = vperm.xlu0 %1951, %v519
        %v1953 = vpop.permute.xlu0 %1952
        %v1955 = vmul.f32 %v1931, %v1941
        %v1956 = vmul.f32 %v1932, %v1941
        %v1957 = vmul.f32 %v1933, %v1945
        %v1958 = vmul.f32 %v1934, %v1945
        %v1959 = vmul.f32 %v1935, %v1949
        %v1960 = vmul.f32 %v1936, %v1949
        %v1961 = vmul.f32 %v1937, %v1953
        %v1962 = vmul.f32 %v1938, %v1953
        %v1963 = vadd.f32 %v1886, %v1955
        %v1964 = vadd.f32 %v1887, %v1956
        %v1965 = vadd.f32 %v1888, %v1957
        %v1966 = vadd.f32 %v1889, %v1958
        %v1967 = vadd.f32 %v1890, %v1959
        %v1968 = vadd.f32 %v1891, %v1960
        %v1969 = vadd.f32 %v1892, %v1961
        %v1970 = vadd.f32 %v1893, %v1962
        %1971 = vrot.lane.b32.xlu0 %v1679, 126
        %v1972 = vpop.permute.xlu0 %1971
        %1973 = vrot.lane.b32.xlu0 %v1680, 126
        %v1974 = vpop.permute.xlu0 %1973
        %1975 = vrot.lane.b32.xlu0 %v1681, 126
        %v1976 = vpop.permute.xlu0 %1975
        %1977 = vrot.lane.b32.xlu0 %v1682, 126
        %v1978 = vpop.permute.xlu0 %1977
        %1979 = vrot.lane.b32.xlu0 %v1683, 126
        %v1980 = vpop.permute.xlu0 %1979
        %1981 = vrot.lane.b32.xlu0 %v1684, 126
        %v1982 = vpop.permute.xlu0 %1981
        %1983 = vrot.lane.b32.xlu0 %v1685, 126
        %v1984 = vpop.permute.xlu0 %1983
        %1985 = vrot.lane.b32.xlu0 %v1686, 126
        %v1986 = vpop.permute.xlu0 %1985
        %v1987 = vsel %vm853, %v1972, %v1980
        %v1988 = vsel %vm853, %v1974, %v1982
        %v1989 = vsel %vm853, %v1976, %v1984
        %v1990 = vsel %vm853, %v1978, %v1986
        %v1991 = vsel %vm853, %v1980, %v1972
        %v1992 = vsel %vm853, %v1982, %v1974
        %v1993 = vsel %vm853, %v1984, %v1976
        %v1994 = vsel %vm853, %v1986, %v1978
        %s1995 = scalar_lea.vmem [#allocation11], 38
        %v1996 = vld [vmem:[%s1995] sm:$0x3]
        %v1998 = vlaneseq
        %v1999 = vshrl.u32 %v1998, 7
        %v2000 = vsub.s32 0, %v1999
        %v2001 = vrot.slane %v1996, %v2000
        %v2002 = vlaneseq
        %v2003 = vshrl.u32 %v2002, 7
        %v2004 = vsub.s32 1, %v2003
        %v2005 = vrot.slane %v1996, %v2004
        %v2008 = vmul.f32 %v1987, %v2001
        %v2009 = vmul.f32 %v1991, %v2005
        %v2010 = vmul.f32 %v1988, %v2001
        %v2011 = vmul.f32 %v1992, %v2005
        %v2012 = vmul.f32 %v1989, %v2001
        %v2013 = vmul.f32 %v1993, %v2005
        %v2014 = vmul.f32 %v1990, %v2001
        %v2015 = vmul.f32 %v1994, %v2005
        %2016 = vset.pattern.permute.xlu0 19
        %2017 = vperm.xlu0 %2016, %v516
        %v2018 = vpop.permute.xlu0 %2017
        %2020 = vset.pattern.permute.xlu0 19
        %2021 = vperm.xlu0 %2020, %v517
        %v2022 = vpop.permute.xlu0 %2021
        %2024 = vset.pattern.permute.xlu0 19
        %2025 = vperm.xlu0 %2024, %v518
        %v2026 = vpop.permute.xlu0 %2025
        %2028 = vset.pattern.permute.xlu0 19
        %2029 = vperm.xlu0 %2028, %v519
        %v2030 = vpop.permute.xlu0 %2029
        %v2032 = vmul.f32 %v2008, %v2018
        %v2033 = vmul.f32 %v2009, %v2018
        %v2034 = vmul.f32 %v2010, %v2022
        %v2035 = vmul.f32 %v2011, %v2022
        %v2036 = vmul.f32 %v2012, %v2026
        %v2037 = vmul.f32 %v2013, %v2026
        %v2038 = vmul.f32 %v2014, %v2030
        %v2039 = vmul.f32 %v2015, %v2030
        %v2040 = vadd.f32 %v1963, %v2032
        %v2041 = vadd.f32 %v1964, %v2033
        %v2042 = vadd.f32 %v1965, %v2034
        %v2043 = vadd.f32 %v1966, %v2035
        %v2044 = vadd.f32 %v1967, %v2036
        %v2045 = vadd.f32 %v1968, %v2037
        %v2046 = vadd.f32 %v1969, %v2038
        %v2047 = vadd.f32 %v1970, %v2039
        %2048 = vrot.lane.b32.xlu0 %v507, 96
        %v2049 = vpop.permute.xlu0 %2048
        %2050 = vrot.lane.b32.xlu0 %v509, 96
        %v2051 = vpop.permute.xlu0 %2050
        %2052 = vrot.lane.b32.xlu0 %v511, 96
        %v2053 = vpop.permute.xlu0 %2052
        %2054 = vrot.lane.b32.xlu0 %v513, 96
        %v2055 = vpop.permute.xlu0 %2054
        %2056 = vrot.lane.b32.xlu0 %v508, 96
        %v2057 = vpop.permute.xlu0 %2056
        %2058 = vrot.lane.b32.xlu0 %v510, 96
        %v2059 = vpop.permute.xlu0 %2058
        %2060 = vrot.lane.b32.xlu0 %v512, 96
        %v2061 = vpop.permute.xlu0 %2060
        %2062 = vrot.lane.b32.xlu0 %v514, 96
        %v2063 = vpop.permute.xlu0 %2062
        %vm2064 = vcmp.lt.s32.totalorder %v537, 96
        %v2065 = vsel %vm2064, %v2049, %v2057
        %v2066 = vsel %vm2064, %v2051, %v2059
        %v2067 = vsel %vm2064, %v2053, %v2061
        %v2068 = vsel %vm2064, %v2055, %v2063
        %v2069 = vsel %vm2064, %v2057, %v2049
        %v2070 = vsel %vm2064, %v2059, %v2051
        %v2071 = vsel %vm2064, %v2061, %v2053
        %v2072 = vsel %vm2064, %v2063, %v2055
        %2073 = vrot.lane.b32.xlu0 %v2065, 2
        %v2074 = vpop.permute.xlu0 %2073
        %2075 = vrot.lane.b32.xlu0 %v2066, 2
        %v2076 = vpop.permute.xlu0 %2075
        %2077 = vrot.lane.b32.xlu0 %v2067, 2
        %v2078 = vpop.permute.xlu0 %2077
        %2079 = vrot.lane.b32.xlu0 %v2068, 2
        %v2080 = vpop.permute.xlu0 %2079
        %2081 = vrot.lane.b32.xlu0 %v2069, 2
        %v2082 = vpop.permute.xlu0 %2081
        %2083 = vrot.lane.b32.xlu0 %v2070, 2
        %v2084 = vpop.permute.xlu0 %2083
        %2085 = vrot.lane.b32.xlu0 %v2071, 2
        %v2086 = vpop.permute.xlu0 %2085
        %2087 = vrot.lane.b32.xlu0 %v2072, 2
        %v2088 = vpop.permute.xlu0 %2087
        %v2089 = vsel %vm563, %v2074, %v2082
        %v2090 = vsel %vm563, %v2076, %v2084
        %v2091 = vsel %vm563, %v2078, %v2086
        %v2092 = vsel %vm563, %v2080, %v2088
        %v2093 = vsel %vm563, %v2082, %v2074
        %v2094 = vsel %vm563, %v2084, %v2076
        %v2095 = vsel %vm563, %v2086, %v2078
        %v2096 = vsel %vm563, %v2088, %v2080
        %s2097 = scalar_lea.vmem [#allocation11], 40
        %v2098 = vld [vmem:[%s2097] sm:$0x3]
        %v2100 = vlaneseq
        %v2101 = vshrl.u32 %v2100, 7
        %v2102 = vsub.s32 0, %v2101
        %v2103 = vrot.slane %v2098, %v2102
        %v2104 = vlaneseq
        %v2105 = vshrl.u32 %v2104, 7
        %v2106 = vsub.s32 1, %v2105
        %v2107 = vrot.slane %v2098, %v2106
        %v2110 = vmul.f32 %v2093, %v2103
        %v2111 = vmul.f32 %v2089, %v2107
        %v2112 = vmul.f32 %v2094, %v2103
        %v2113 = vmul.f32 %v2090, %v2107
        %v2114 = vmul.f32 %v2095, %v2103
        %v2115 = vmul.f32 %v2091, %v2107
        %v2116 = vmul.f32 %v2096, %v2103
        %v2117 = vmul.f32 %v2092, %v2107
        %2118 = vset.pattern.permute.xlu0 20
        %2119 = vperm.xlu0 %2118, %v516
        %v2120 = vpop.permute.xlu0 %2119
        %2122 = vset.pattern.permute.xlu0 20
        %2123 = vperm.xlu0 %2122, %v517
        %v2124 = vpop.permute.xlu0 %2123
        %2126 = vset.pattern.permute.xlu0 20
        %2127 = vperm.xlu0 %2126, %v518
        %v2128 = vpop.permute.xlu0 %2127
        %2130 = vset.pattern.permute.xlu0 20
        %2131 = vperm.xlu0 %2130, %v519
        %v2132 = vpop.permute.xlu0 %2131
        %v2134 = vmul.f32 %v2110, %v2120
        %v2135 = vmul.f32 %v2111, %v2120
        %v2136 = vmul.f32 %v2112, %v2124
        %v2137 = vmul.f32 %v2113, %v2124
        %v2138 = vmul.f32 %v2114, %v2128
        %v2139 = vmul.f32 %v2115, %v2128
        %v2140 = vmul.f32 %v2116, %v2132
        %v2141 = vmul.f32 %v2117, %v2132
        %v2142 = vadd.f32 %v2040, %v2134
        %v2143 = vadd.f32 %v2041, %v2135
        %v2144 = vadd.f32 %v2042, %v2136
        %v2145 = vadd.f32 %v2043, %v2137
        %v2146 = vadd.f32 %v2044, %v2138
        %v2147 = vadd.f32 %v2045, %v2139
        %v2148 = vadd.f32 %v2046, %v2140
        %v2149 = vadd.f32 %v2047, %v2141
        %2150 = vrot.lane.b32.xlu0 %v2065, 1
        %v2151 = vpop.permute.xlu0 %2150
        %2152 = vrot.lane.b32.xlu0 %v2066, 1
        %v2153 = vpop.permute.xlu0 %2152
        %2154 = vrot.lane.b32.xlu0 %v2067, 1
        %v2155 = vpop.permute.xlu0 %2154
        %2156 = vrot.lane.b32.xlu0 %v2068, 1
        %v2157 = vpop.permute.xlu0 %2156
        %2158 = vrot.lane.b32.xlu0 %v2069, 1
        %v2159 = vpop.permute.xlu0 %2158
        %2160 = vrot.lane.b32.xlu0 %v2070, 1
        %v2161 = vpop.permute.xlu0 %2160
        %2162 = vrot.lane.b32.xlu0 %v2071, 1
        %v2163 = vpop.permute.xlu0 %2162
        %2164 = vrot.lane.b32.xlu0 %v2072, 1
        %v2165 = vpop.permute.xlu0 %2164
        %v2166 = vsel %vm644, %v2151, %v2159
        %v2167 = vsel %vm644, %v2153, %v2161
        %v2168 = vsel %vm644, %v2155, %v2163
        %v2169 = vsel %vm644, %v2157, %v2165
        %v2170 = vsel %vm644, %v2159, %v2151
        %v2171 = vsel %vm644, %v2161, %v2153
        %v2172 = vsel %vm644, %v2163, %v2155
        %v2173 = vsel %vm644, %v2165, %v2157
        %s2174 = scalar_lea.vmem [#allocation11], 42
        %v2175 = vld [vmem:[%s2174] sm:$0x3]
        %v2177 = vlaneseq
        %v2178 = vshrl.u32 %v2177, 7
        %v2179 = vsub.s32 0, %v2178
        %v2180 = vrot.slane %v2175, %v2179
        %v2181 = vlaneseq
        %v2182 = vshrl.u32 %v2181, 7
        %v2183 = vsub.s32 1, %v2182
        %v2184 = vrot.slane %v2175, %v2183
        %v2187 = vmul.f32 %v2170, %v2180
        %v2188 = vmul.f32 %v2166, %v2184
        %v2189 = vmul.f32 %v2171, %v2180
        %v2190 = vmul.f32 %v2167, %v2184
        %v2191 = vmul.f32 %v2172, %v2180
        %v2192 = vmul.f32 %v2168, %v2184
        %v2193 = vmul.f32 %v2173, %v2180
        %v2194 = vmul.f32 %v2169, %v2184
        %2195 = vset.pattern.permute.xlu0 21
        %2196 = vperm.xlu0 %2195, %v516
        %v2197 = vpop.permute.xlu0 %2196
        %2199 = vset.pattern.permute.xlu0 21
        %2200 = vperm.xlu0 %2199, %v517
        %v2201 = vpop.permute.xlu0 %2200
        %2203 = vset.pattern.permute.xlu0 21
        %2204 = vperm.xlu0 %2203, %v518
        %v2205 = vpop.permute.xlu0 %2204
        %2207 = vset.pattern.permute.xlu0 21
        %2208 = vperm.xlu0 %2207, %v519
        %v2209 = vpop.permute.xlu0 %2208
        %v2211 = vmul.f32 %v2187, %v2197
        %v2212 = vmul.f32 %v2188, %v2197
        %v2213 = vmul.f32 %v2189, %v2201
        %v2214 = vmul.f32 %v2190, %v2201
        %v2215 = vmul.f32 %v2191, %v2205
        %v2216 = vmul.f32 %v2192, %v2205
        %v2217 = vmul.f32 %v2193, %v2209
        %v2218 = vmul.f32 %v2194, %v2209
        %v2219 = vadd.f32 %v2142, %v2211
        %v2220 = vadd.f32 %v2143, %v2212
        %v2221 = vadd.f32 %v2144, %v2213
        %v2222 = vadd.f32 %v2145, %v2214
        %v2223 = vadd.f32 %v2146, %v2215
        %v2224 = vadd.f32 %v2147, %v2216
        %v2225 = vadd.f32 %v2148, %v2217
        %v2226 = vadd.f32 %v2149, %v2218
        %s2227 = scalar_lea.vmem [#allocation11], 44
        %v2228 = vld [vmem:[%s2227] sm:$0x3]
        %v2230 = vlaneseq
        %v2231 = vshrl.u32 %v2230, 7
        %v2232 = vsub.s32 0, %v2231
        %v2233 = vrot.slane %v2228, %v2232
        %v2234 = vlaneseq
        %v2235 = vshrl.u32 %v2234, 7
        %v2236 = vsub.s32 1, %v2235
        %v2237 = vrot.slane %v2228, %v2236
        %v2240 = vmul.f32 %v2065, %v2233
        %v2241 = vmul.f32 %v2069, %v2237
        %v2242 = vmul.f32 %v2066, %v2233
        %v2243 = vmul.f32 %v2070, %v2237
        %v2244 = vmul.f32 %v2067, %v2233
        %v2245 = vmul.f32 %v2071, %v2237
        %v2246 = vmul.f32 %v2068, %v2233
        %v2247 = vmul.f32 %v2072, %v2237
        %2248 = vset.pattern.permute.xlu0 22
        %2249 = vperm.xlu0 %2248, %v516
        %v2250 = vpop.permute.xlu0 %2249
        %2252 = vset.pattern.permute.xlu0 22
        %2253 = vperm.xlu0 %2252, %v517
        %v2254 = vpop.permute.xlu0 %2253
        %2256 = vset.pattern.permute.xlu0 22
        %2257 = vperm.xlu0 %2256, %v518
        %v2258 = vpop.permute.xlu0 %2257
        %2260 = vset.pattern.permute.xlu0 22
        %2261 = vperm.xlu0 %2260, %v519
        %v2262 = vpop.permute.xlu0 %2261
        %v2264 = vmul.f32 %v2240, %v2250
        %v2265 = vmul.f32 %v2241, %v2250
        %v2266 = vmul.f32 %v2242, %v2254
        %v2267 = vmul.f32 %v2243, %v2254
        %v2268 = vmul.f32 %v2244, %v2258
        %v2269 = vmul.f32 %v2245, %v2258
        %v2270 = vmul.f32 %v2246, %v2262
        %v2271 = vmul.f32 %v2247, %v2262
        %v2272 = vadd.f32 %v2219, %v2264
        %v2273 = vadd.f32 %v2220, %v2265
        %v2274 = vadd.f32 %v2221, %v2266
        %v2275 = vadd.f32 %v2222, %v2267
        %v2276 = vadd.f32 %v2223, %v2268
        %v2277 = vadd.f32 %v2224, %v2269
        %v2278 = vadd.f32 %v2225, %v2270
        %v2279 = vadd.f32 %v2226, %v2271
        %2280 = vrot.lane.b32.xlu0 %v2065, 127
        %v2281 = vpop.permute.xlu0 %2280
        %2282 = vrot.lane.b32.xlu0 %v2066, 127
        %v2283 = vpop.permute.xlu0 %2282
        %2284 = vrot.lane.b32.xlu0 %v2067, 127
        %v2285 = vpop.permute.xlu0 %2284
        %2286 = vrot.lane.b32.xlu0 %v2068, 127
        %v2287 = vpop.permute.xlu0 %2286
        %2288 = vrot.lane.b32.xlu0 %v2069, 127
        %v2289 = vpop.permute.xlu0 %2288
        %2290 = vrot.lane.b32.xlu0 %v2070, 127
        %v2291 = vpop.permute.xlu0 %2290
        %2292 = vrot.lane.b32.xlu0 %v2071, 127
        %v2293 = vpop.permute.xlu0 %2292
        %2294 = vrot.lane.b32.xlu0 %v2072, 127
        %v2295 = vpop.permute.xlu0 %2294
        %v2296 = vsel %vm775, %v2281, %v2289
        %v2297 = vsel %vm775, %v2283, %v2291
        %v2298 = vsel %vm775, %v2285, %v2293
        %v2299 = vsel %vm775, %v2287, %v2295
        %v2300 = vsel %vm775, %v2289, %v2281
        %v2301 = vsel %vm775, %v2291, %v2283
        %v2302 = vsel %vm775, %v2293, %v2285
        %v2303 = vsel %vm775, %v2295, %v2287
        %s2304 = scalar_lea.vmem [#allocation11], 46
        %v2305 = vld [vmem:[%s2304] sm:$0x3]
        %v2307 = vlaneseq
        %v2308 = vshrl.u32 %v2307, 7
        %v2309 = vsub.s32 0, %v2308
        %v2310 = vrot.slane %v2305, %v2309
        %v2311 = vlaneseq
        %v2312 = vshrl.u32 %v2311, 7
        %v2313 = vsub.s32 1, %v2312
        %v2314 = vrot.slane %v2305, %v2313
        %v2317 = vmul.f32 %v2296, %v2310
        %v2318 = vmul.f32 %v2300, %v2314
        %v2319 = vmul.f32 %v2297, %v2310
        %v2320 = vmul.f32 %v2301, %v2314
        %v2321 = vmul.f32 %v2298, %v2310
        %v2322 = vmul.f32 %v2302, %v2314
        %v2323 = vmul.f32 %v2299, %v2310
        %v2324 = vmul.f32 %v2303, %v2314
        %2325 = vset.pattern.permute.xlu0 23
        %2326 = vperm.xlu0 %2325, %v516
        %v2327 = vpop.permute.xlu0 %2326
        %2329 = vset.pattern.permute.xlu0 23
        %2330 = vperm.xlu0 %2329, %v517
        %v2331 = vpop.permute.xlu0 %2330
        %2333 = vset.pattern.permute.xlu0 23
        %2334 = vperm.xlu0 %2333, %v518
        %v2335 = vpop.permute.xlu0 %2334
        %2337 = vset.pattern.permute.xlu0 23
        %2338 = vperm.xlu0 %2337, %v519
        %v2339 = vpop.permute.xlu0 %2338
        %v2341 = vmul.f32 %v2317, %v2327
        %v2342 = vmul.f32 %v2318, %v2327
        %v2343 = vmul.f32 %v2319, %v2331
        %v2344 = vmul.f32 %v2320, %v2331
        %v2345 = vmul.f32 %v2321, %v2335
        %v2346 = vmul.f32 %v2322, %v2335
        %v2347 = vmul.f32 %v2323, %v2339
        %v2348 = vmul.f32 %v2324, %v2339
        %v2349 = vadd.f32 %v2272, %v2341
        %v2350 = vadd.f32 %v2273, %v2342
        %v2351 = vadd.f32 %v2274, %v2343
        %v2352 = vadd.f32 %v2275, %v2344
        %v2353 = vadd.f32 %v2276, %v2345
        %v2354 = vadd.f32 %v2277, %v2346
        %v2355 = vadd.f32 %v2278, %v2347
        %v2356 = vadd.f32 %v2279, %v2348
        %2357 = vrot.lane.b32.xlu0 %v2065, 126
        %v2358 = vpop.permute.xlu0 %2357
        %2359 = vrot.lane.b32.xlu0 %v2066, 126
        %v2360 = vpop.permute.xlu0 %2359
        %2361 = vrot.lane.b32.xlu0 %v2067, 126
        %v2362 = vpop.permute.xlu0 %2361
        %2363 = vrot.lane.b32.xlu0 %v2068, 126
        %v2364 = vpop.permute.xlu0 %2363
        %2365 = vrot.lane.b32.xlu0 %v2069, 126
        %v2366 = vpop.permute.xlu0 %2365
        %2367 = vrot.lane.b32.xlu0 %v2070, 126
        %v2368 = vpop.permute.xlu0 %2367
        %2369 = vrot.lane.b32.xlu0 %v2071, 126
        %v2370 = vpop.permute.xlu0 %2369
        %2371 = vrot.lane.b32.xlu0 %v2072, 126
        %v2372 = vpop.permute.xlu0 %2371
        %v2373 = vsel %vm853, %v2358, %v2366
        %v2374 = vsel %vm853, %v2360, %v2368
        %v2375 = vsel %vm853, %v2362, %v2370
        %v2376 = vsel %vm853, %v2364, %v2372
        %v2377 = vsel %vm853, %v2366, %v2358
        %v2378 = vsel %vm853, %v2368, %v2360
        %v2379 = vsel %vm853, %v2370, %v2362
        %v2380 = vsel %vm853, %v2372, %v2364
        %s2381 = scalar_lea.vmem [#allocation11], 48
        %v2382 = vld [vmem:[%s2381] sm:$0x3]
        %v2384 = vlaneseq
        %v2385 = vshrl.u32 %v2384, 7
        %v2386 = vsub.s32 0, %v2385
        %v2387 = vrot.slane %v2382, %v2386
        %v2388 = vlaneseq
        %v2389 = vshrl.u32 %v2388, 7
        %v2390 = vsub.s32 1, %v2389
        %v2391 = vrot.slane %v2382, %v2390
        %v2394 = vmul.f32 %v2373, %v2387
        %v2395 = vmul.f32 %v2377, %v2391
        %v2396 = vmul.f32 %v2374, %v2387
        %v2397 = vmul.f32 %v2378, %v2391
        %v2398 = vmul.f32 %v2375, %v2387
        %v2399 = vmul.f32 %v2379, %v2391
        %v2400 = vmul.f32 %v2376, %v2387
        %v2401 = vmul.f32 %v2380, %v2391
        %2402 = vset.pattern.permute.xlu0 24
        %2403 = vperm.xlu0 %2402, %v516
        %v2404 = vpop.permute.xlu0 %2403
        %2406 = vset.pattern.permute.xlu0 24
        %2407 = vperm.xlu0 %2406, %v517
        %v2408 = vpop.permute.xlu0 %2407
        %2410 = vset.pattern.permute.xlu0 24
        %2411 = vperm.xlu0 %2410, %v518
        %v2412 = vpop.permute.xlu0 %2411
        %2414 = vset.pattern.permute.xlu0 24
        %2415 = vperm.xlu0 %2414, %v519
        %v2416 = vpop.permute.xlu0 %2415
        %v2418 = vmul.f32 %v2394, %v2404
        %v2419 = vmul.f32 %v2395, %v2404
        %v2420 = vmul.f32 %v2396, %v2408
        %v2421 = vmul.f32 %v2397, %v2408
        %v2422 = vmul.f32 %v2398, %v2412
        %v2423 = vmul.f32 %v2399, %v2412
        %v2424 = vmul.f32 %v2400, %v2416
        %v2425 = vmul.f32 %v2401, %v2416
        %v2426 = vadd.f32 %v2349, %v2418
        %v2427 = vadd.f32 %v2350, %v2419
        %v2428 = vadd.f32 %v2351, %v2420
        %v2429 = vadd.f32 %v2352, %v2421
        %v2430 = vadd.f32 %v2353, %v2422
        %v2431 = vadd.f32 %v2354, %v2423
        %v2432 = vadd.f32 %v2355, %v2424
        %v2433 = vadd.f32 %v2356, %v2425
        %s2434 = scalar_lea.vmem [#allocation10], %s358
        %v2435 = vld [vmem:[%s2434] sm:$0xff]
        %v2436 = vld [vmem:[%s2434 + $0x8] sm:$0xff]
        %v2437 = vld [vmem:[%s2434 + $0x10] sm:$0xff]
        %v2438 = vld [vmem:[%s2434 + $0x18] sm:$0xff]
        %2440 = vset.pattern.permute.xlu0 0
        %2441 = vperm.xlu0 %2440, %v2435
        %v2442 = vpop.permute.xlu0 %2441
        %2445 = vset.pattern.permute.xlu0 0
        %2446 = vperm.xlu0 %2445, %v2436
        %v2447 = vpop.permute.xlu0 %2446
        %2450 = vset.pattern.permute.xlu0 0
        %2451 = vperm.xlu0 %2450, %v2437
        %v2452 = vpop.permute.xlu0 %2451
        %2455 = vset.pattern.permute.xlu0 0
        %2456 = vperm.xlu0 %2455, %v2438
        %v2457 = vpop.permute.xlu0 %2456
        %v2459 = vadd.f32 %v2426, %v2442
        %v2460 = vadd.f32 %v2427, %v2442
        %v2461 = vadd.f32 %v2428, %v2447
        %v2462 = vadd.f32 %v2429, %v2447
        %v2463 = vadd.f32 %v2430, %v2452
        %v2464 = vadd.f32 %v2431, %v2452
        %v2465 = vadd.f32 %v2432, %v2457
        %v2466 = vadd.f32 %v2433, %v2457
        %v2467 = vsub.f32 0.0, %v2459
        %v2468 = vsub.f32 0.0, %v2460
        %v2469 = vsub.f32 0.0, %v2461
        %v2470 = vsub.f32 0.0, %v2462
        %v2471 = vsub.f32 0.0, %v2463
        %v2472 = vsub.f32 0.0, %v2464
        %v2473 = vsub.f32 0.0, %v2465
        %v2474 = vsub.f32 0.0, %v2466
        %v2475 = vmul.f32 %v2467, 1.442695
        %v2476 = vpow.pop %v2475
        %v2477 = vmul.f32 %v2468, 1.442695
        %v2478 = vpow.pop %v2477
        %v2479 = vmul.f32 %v2469, 1.442695
        %v2480 = vpow.pop %v2479
        %v2481 = vmul.f32 %v2470, 1.442695
        %v2482 = vpow.pop %v2481
        %v2483 = vmul.f32 %v2471, 1.442695
        %v2484 = vpow.pop %v2483
        %v2485 = vmul.f32 %v2472, 1.442695
        %v2486 = vpow.pop %v2485
        %v2487 = vmul.f32 %v2473, 1.442695
        %v2488 = vpow.pop %v2487
        %v2489 = vmul.f32 %v2474, 1.442695
        %v2490 = vpow.pop %v2489
        %v2491 = vadd.f32 %v2476, 1.0
        %v2492 = vadd.f32 %v2478, 1.0
        %v2493 = vadd.f32 %v2480, 1.0
        %v2494 = vadd.f32 %v2482, 1.0
        %v2495 = vadd.f32 %v2484, 1.0
        %v2496 = vadd.f32 %v2486, 1.0
        %v2497 = vadd.f32 %v2488, 1.0
        %v2498 = vadd.f32 %v2490, 1.0
        %v2499 = vrcp.pop %v2491
        %v2500 = vrcp.pop %v2492
        %v2501 = vrcp.pop %v2493
        %v2502 = vrcp.pop %v2494
        %v2503 = vrcp.pop %v2495
        %v2504 = vrcp.pop %v2496
        %v2505 = vrcp.pop %v2497
        %v2506 = vrcp.pop %v2498
        %s2507 = sshra.s32 %s358, 3
        %s2508 = sand.u32 %s358, 7
        %s2509 = smul.u32 %s2507, 2
        %s2510 = smul.addr %s2509, 8
        %s2511 = scalar_lea.vmem %s308, %s2510 [#allocation2]
        %v2512 = vld [vmem:[%s2511] sm:$0xff]
        %v2513 = vld [vmem:[%s2511 + $0x8] sm:$0xff]
        %v2514 = vld [vmem:[%s2511 + $0x10] sm:$0xff]
        %v2515 = vld [vmem:[%s2511 + $0x18] sm:$0xff]
        %v2516 = vld [vmem:[%s2511 + $0x20] sm:$0xff]
        %v2517 = vld [vmem:[%s2511 + $0x28] sm:$0xff]
        %v2518 = vld [vmem:[%s2511 + $0x30] sm:$0xff]
        %v2519 = vld [vmem:[%s2511 + $0x38] sm:$0xff]
        %v2520 = vmul.f32 %v2512, %v2499
        %v2521 = vmul.f32 %v2513, %v2500
        %v2522 = vmul.f32 %v2514, %v2501
        %v2523 = vmul.f32 %v2515, %v2502
        %v2524 = vmul.f32 %v2516, %v2503
        %v2525 = vmul.f32 %v2517, %v2504
        %v2526 = vmul.f32 %v2518, %v2505
        %v2527 = vmul.f32 %v2519, %v2506
        %2528 = vst [vmem:[%s356] sm:$0xff] %v2520
        %2529 = vst [vmem:[%s356 + $0x8] sm:$0xff] %v2521
        %2530 = vst [vmem:[%s356 + $0x10] sm:$0xff] %v2522
        %2531 = vst [vmem:[%s356 + $0x18] sm:$0xff] %v2523
        %2532 = vst [vmem:[%s356 + $0x20] sm:$0xff] %v2524
        %2533 = vst [vmem:[%s356 + $0x28] sm:$0xff] %v2525
        %2534 = vst [vmem:[%s356 + $0x30] sm:$0xff] %v2526
        %2535 = vst [vmem:[%s356 + $0x38] sm:$0xff] %v2527
        %s2536 = sand.u32 %s179, 1
        %s2537 = scalar_lea.sflag [#allocation4], %s2536
        %s2538 = sand.u32 %s179, 1
        %s2539 = smul.addr %s2538, 64
        %s2540 = scalar_lea.vmem [#allocation13], %s2539
        // Predicated region
        $region69: #{tpu_custom_call.1} parent=43 // pred_check
          %p2541 = pneg %p189
        $region70: #{tpu_custom_call.1} parent=43 // pred_check_branch
          %2543 = sbr.rel (%p2541) target = $region72
        $region71: #{tpu_custom_call.1} parent=43 // pred_region
          %s2544 = smul.u32 4, %s31
          %s2546 = ssub.s32 1024, 1024
          %2547 = vsyncadd %s2537, %s2546
          %s2548 = smul.addr %s2544, 2
          %s2549 = smul.addr %s30, 16
          %s2550 = sadd.s32 %s2548, %s2549
          %s2551 = smul.addr %s2550, 128
          %s2552 = scalar_lea.hbm %s6, %s2551
          %s2553 = sshll.u32 %s2540, 4
          %s2554 = int_to_ptr.vmem [resolvable:$true] %s2553
          %2559 = dma.vmem_to_hbm [thread:$0]  %s2554, 1024, %s2552, %s2537, 256, 256, 16
        $region72: #{tpu_custom_call.1} parent=43 // pred_fallthru
          _
      $region44: #{tpu_custom_call.1} parent=5 // pred_fallthru
        _
      %p2560 = scmp.le.s32.totalorder 2, %s21
      // Predicated region
      $region73: #{tpu_custom_call.1} parent=5 // pred_check
        %p2561 = pneg %p2560
      $region74: #{tpu_custom_call.1} parent=5 // pred_check_branch
        %2563 = sbr.rel (%p2561) target = $region76
      $region75: #{tpu_custom_call.1} parent=5 // pred_region
        %s2564 = ssub.s32 %s21, 2
        // Predicated region
        $region77: #{tpu_custom_call.1} parent=75 // pred_check
          %p2565 = pneg %p195
        $region78: #{tpu_custom_call.1} parent=75 // pred_check_branch
          %2567 = sbr.rel (%p2565) target = $region80
        $region79: #{tpu_custom_call.1} parent=75 // pred_region
          %s2568 = sand.u32 %s180, 1
          %s2569 = scalar_lea.sflag [#allocation4], %s2568
          %s2570 = sand.u32 %s180, 1
          %s2571 = smul.addr %s2570, 64
          %s2572 = scalar_lea.vmem [#allocation13], %s2571
          %2573 = dma.done %s2569, 1024
        $region80: #{tpu_custom_call.1} parent=75 // pred_fallthru
          _
      $region76: #{tpu_custom_call.1} parent=5 // pred_fallthru
        _
    $region6: #{tpu_custom_call.1} parent=1 // loop_footer
      %s25 = sadd.s32 1, %s21
    $region7: #{tpu_custom_call.1} parent=1 // loop_footer_branch
      %20 = sbr.rel target = $region3
    $region8: #{tpu_custom_call.1} parent=1 // loop_exit
      _
    %2574 = vsyncpa [#allocation3], 1
    %s2575 = scalar_lea.sflag [#allocation3], 1
    %2576 = vsyncpa %s2575, 1
    %2577 = vsyncpa [#allocation6], 1
    %2578 = vsyncpa [#allocation9], 1
    %2579 = vsyncpa [#allocation12], 1
    %2580 = vsyncpa [#allocation4], 1
    %s2581 = scalar_lea.sflag [#allocation4], 1
    %2582 = vsyncpa %s2581, 1

</llo_original>
